<compile_context>
chip_gen: v6e
topology: v6e:2x2x1
jax: 0.10.0
libtpu: 0.0.40
codegen_flags: <defaults>
</compile_context>

<pallas_src>
import functools

import jax
import jax.numpy as jnp
import numpy as np
from jax.experimental import pallas as pl
from jax.experimental.pallas import tpu as pltpu


def _round_up(x, m):
    return ((x + m - 1) // m) * m


def conv_bn_relu(x, weight, gamma, beta, running_mean, running_var,
                 *, stride=1, padding=1, eps=1e-3):
    """x: NCHW float32.  weight: [Cout, Cin, KH, KW] (PyTorch OIHW layout)."""
    if stride != 1:
        raise NotImplementedError("only stride=1 is supported")  # TODO(synk)
    N, Cin, H, W = x.shape
    Cout, _, KH, KW = weight.shape
    P = padding
    H_out = H + 2 * P - KH + 1
    W_out = W + 2 * P - KW + 1

    # ---- static geometry of the flat ("row-wrap") layout ----------------------------
    # Flat output index p = oh*Wr + ow reads flat-scratch lane  base + p + (kh-P)*Wr + (kw-P)
    # where the scratch holds image row ih at lanes [base + ih*Wr, base + ih*Wr + W).
    cin_p = _round_up(Cin, 16)                 # bf16 sublane tile = 16
    cout_p = _round_up(Cout, 16)
    HW = H * W
    Wr = max(W, W_out)                         # row pitch of the flat layout
    p_out = H_out * Wr                         # flat output extent (cols >= W_out are garbage)
    p_pad = _round_up(p_out, 128)              # lane-dense output width
    base = _round_up(P * (Wr + 1), 128)        # aligned base >= P*Wr + P, so reads stay >= 0
    k_stack = KH * KW * cin_p                  # real contraction depth
    k_pad = _round_up(k_stack, 128)            # padded contraction depth (MXU friendly)
    n_taps = KH * KW
    max_off = base + max((kh - P) * Wr + (kw - P)
                         for kh in range(KH) for kw in range(KW))
    flat_w = _round_up(max(max_off + p_pad, base + (H - 1) * Wr + W), 128)

    # ---- batch tile: whole batch per step while it fits a modest VMEM budget --------
    per_image = (Cin * HW * 4            # x block (f32)
                 + cout_p * p_pad * 4    # output block (f32)
                 + k_pad * p_pad * 2)    # im2col scratch lanes (bf16)
    budget = 6 * 1024 * 1024
    NB = max(1, min(N, budget // max(per_image, 1)))
    while N % NB:                        # keep the grid exact
        NB -= 1

    # ---- input: free reshape only, no pad / no dtype copy in HBM --------------------
    x_flat = x.reshape(N, Cin, HW)

    # ---- eval-mode BN as per-channel scale/shift, applied in the f32 epilogue -------
    scale = (gamma / jnp.sqrt(running_var + eps)).astype(jnp.float32)
    shift = (beta - running_mean * scale).astype(jnp.float32)
    scale_pack = jnp.pad(scale, (0, cout_p - Cout)).reshape(cout_p, 1)
    shift_pack = jnp.pad(shift, (0, cout_p - Cout)).reshape(cout_p, 1)

    # ---- weight packed as (cout_p, k_pad); column (kh*KW+kw)*cin_p + c <-> tap/chan --
    w_t = jnp.transpose(weight, (0, 2, 3, 1))                        # (Cout, KH, KW, Cin)
    w_t = jnp.pad(w_t, ((0, cout_p - Cout), (0, 0), (0, 0), (0, cin_p - Cin)))
    w_pack = jnp.pad(w_t.reshape(cout_p, k_stack), ((0, 0), (0, k_pad - k_stack)))
    w_pack = w_pack.astype(jnp.bfloat16)

    # ---- per-tap {0,1} validity masks (compile-time constants) ----------------------
    pp = np.arange(p_pad)
    oh_idx, ow_idx = pp // Wr, pp % Wr
    masks_np = np.zeros((n_taps, p_pad), np.float32)
    for kh in range(KH):
        for kw in range(KW):
            ih = oh_idx + kh - P
            iw = ow_idx + kw - P
            valid = (ih >= 0) & (ih < H) & (iw >= 0) & (iw < W)
            masks_np[kh * KW + kw] = valid.astype(np.float32)
    masks = jnp.asarray(masks_np)

    def kernel(x_ref, w_ref, scale_ref, shift_ref, mask_ref, o_ref, xflat_ref, xs_ref):
        # x_ref:     (NB, Cin, HW)       f32   raw images, flattened spatial, no halo
        # w_ref:     (cout_p, k_pad)     bf16  packed conv weight
        # scale_ref: (cout_p, 1)         f32   BN scale (f32 epilogue)
        # shift_ref: (cout_p, 1)         f32   BN shift
        # mask_ref:  (n_taps, p_pad)     f32   per-tap validity masks
        # o_ref:     (NB, cout_p, p_pad) f32
        # xflat_ref: (cin_p, flat_w)     f32   zero-halo flat image scratch
        # xs_ref:    (k_pad, NB*p_pad)   bf16  stacked im2col matmul operand

        # Masked-out taps still need finite data (NaN*0 = NaN) -> zero the halo scratch.
        xflat_ref[...] = jnp.zeros((cin_p, flat_w), jnp.float32)
        if k_pad > k_stack:   # zero the contraction-padding rows of the im2col stack
            xs_ref[k_stack:k_pad, :] = jnp.zeros((k_pad - k_stack, NB * p_pad),
                                                 jnp.bfloat16)

        for n in range(NB):                              # static unroll over the batch tile
            # Place image n into the flat scratch (f32, straight from the HBM block).
            if Wr == W:                                  # contiguous rows: one aligned store
                xflat_ref[0:Cin, base:base + HW] = x_ref[n]
            else:                                        # row pitch != W: one store per row
                for ih in range(H):
                    xflat_ref[0:Cin, base + ih * Wr:base + ih * Wr + W] = (
                        x_ref[n, :, ih * W:(ih + 1) * W])

            # KH*KW one-time shifted copies into the stacked im2col operand (bf16 cast
            # happens here, in-register).  For very large images read the slabs straight
            # from xflat_ref instead of materializing the full value.
            xfv = xflat_ref[...]                          # (cin_p, flat_w) f32
            for kh in range(KH):
                for kw in range(KW):
                    t = kh * KW + kw
                    off = base + (kh - P) * Wr + (kw - P)
                    slab = xfv[:, off:off + p_pad] * mask_ref[t:t + 1, :]
                    xs_ref[t * cin_p:(t + 1) * cin_p,
                           n * p_pad:(n + 1) * p_pad] = slab.astype(jnp.bfloat16)

        # One MXU pass for the whole batch tile: (cout_p, k_pad) @ (k_pad, NB*p_pad).
        acc = jnp.dot(w_ref[...], xs_ref[...], preferred_element_type=jnp.float32)
        y = jnp.maximum(acc * scale_ref[...] + shift_ref[...], 0.0)
        for n in range(NB):
            o_ref[n] = y[:, n * p_pad:(n + 1) * p_pad].astype(o_ref.dtype)

    out_f = pl.pallas_call(
        kernel,
        out_shape=jax.ShapeDtypeStruct((N, cout_p, p_pad), jnp.float32),
        grid_spec=pltpu.PrefetchScalarGridSpec(
            num_scalar_prefetch=0,
            grid=(N // NB,),
            in_specs=[
                pl.BlockSpec((NB, Cin, HW), lambda b: (b, 0, 0)),
                pl.BlockSpec((cout_p, k_pad), lambda b: (0, 0)),
                pl.BlockSpec((cout_p, 1), lambda b: (0, 0)),
                pl.BlockSpec((cout_p, 1), lambda b: (0, 0)),
                pl.BlockSpec((n_taps, p_pad), lambda b: (0, 0)),
            ],
            out_specs=pl.BlockSpec((NB, cout_p, p_pad), lambda b: (b, 0, 0)),
            scratch_shapes=[
                pltpu.VMEM((cin_p, flat_w), jnp.float32),       # zero-halo flat image
                pltpu.VMEM((k_pad, NB * p_pad), jnp.bfloat16),  # stacked im2col operand
            ],
        ),
        compiler_params=pltpu.CompilerParams(
            dimension_semantics=("parallel",),    # batch tiles are independent
        ),
    )(x_flat, w_pack, scale_pack, shift_pack, masks)

    # Drop channel padding, lane padding and (if any) row-wrap garbage columns.
    out = out_f[:, :Cout, :p_out].reshape(N, Cout, H_out, Wr)[:, :, :, :W_out]
    return out


def _reference(x, weight, gamma, beta, running_mean, running_var,
               *, stride=1, padding=1, eps=1e-3):
    y = jax.lax.conv_general_dilated(
        x, weight, window_strides=(stride, stride),
        padding=((padding, padding), (padding, padding)),
        dimension_numbers=("NCHW", "OIHW", "NCHW"))
    scale = (gamma / jnp.sqrt(running_var + eps)).reshape(1, -1, 1, 1)
    shift = (beta - running_mean * gamma / jnp.sqrt(running_var + eps)).reshape(1, -1, 1, 1)
    return jnp.maximum(y * scale + shift, 0.0)


if __name__ == "__main__":
    key = jax.random.PRNGKey(0)
    k_x, k_w, k_g, k_b, k_m, k_v = jax.random.split(key, 6)

    # Small shapes consistent with the module: ConvBnRelu(4, 8, kernel_size=3, padding=1)
    N, Cin, H, W = 2, 4, 16, 16
    Cout, KH, KW = 8, 3, 3

    x = jax.random.normal(k_x, (N, Cin, H, W), dtype=jnp.float32)
    weight = jax.random.normal(k_w, (Cout, Cin, KH, KW), dtype=jnp.float32) * 0.1
    gamma = 1.0 + 0.1 * jax.random.normal(k_g, (Cout,), dtype=jnp.float32)
    beta = 0.1 * jax.random.normal(k_b, (Cout,), dtype=jnp.float32)
    running_mean = 0.1 * jax.random.normal(k_m, (Cout,), dtype=jnp.float32)
    running_var = 1.0 + 0.1 * jax.random.uniform(k_v, (Cout,), dtype=jnp.float32)

    fn = jax.jit(functools.partial(conv_bn_relu, stride=1, padding=1, eps=1e-3))
    out = fn(x, weight, gamma, beta, running_mean, running_var)
    jax.block_until_ready(out)

    ref = _reference(x, weight, gamma, beta, running_mean, running_var,
                     stride=1, padding=1, eps=1e-3)
    assert out.shape == (N, Cout, H, W), out.shape
    # bf16 matmul operands with f32 accumulation/epilogue -> relaxed tolerance.
    err = float(jnp.max(jnp.abs(out - ref)))
    assert err < 5e-2, err

    print("KERNEL_OK")
</pallas_src>

<mosaic_0001>
module attributes {stable_mosaic.version = 11 : i64} {
  func.func @kernel(%arg0: i32, %arg1: memref<2x4x256xf32, #tpu.memory_space<vmem>>, %arg2: memref<16x256xbf16, #tpu.memory_space<vmem>>, %arg3: memref<16x1xf32, #tpu.memory_space<vmem>>, %arg4: memref<16x1xf32, #tpu.memory_space<vmem>>, %arg5: memref<9x256xf32, #tpu.memory_space<vmem>>, %arg6: memref<2x16x256xf32, #tpu.memory_space<vmem>>, %arg7: memref<16x512xf32, #tpu.memory_space<vmem>>, %arg8: memref<256x512xbf16, #tpu.memory_space<vmem>>) attributes {dimension_semantics = [#tpu.dimension_semantics<parallel>], iteration_bounds = array<i64: 1>, scalar_prefetch = 0 : i64, scratch_operands = 2 : i64, tpu.core_type = #tpu.core_type<tc>, window_params = [{transform_indices = @transform_0, window_bounds = array<i64: 2, 4, 256>}, {pipeline_mode = #tpu.pipeline_mode<synchronous>, transform_indices = @transform_1, window_bounds = array<i64: 16, 256>}, {pipeline_mode = #tpu.pipeline_mode<synchronous>, transform_indices = @transform_2, window_bounds = array<i64: 16, 1>}, {pipeline_mode = #tpu.pipeline_mode<synchronous>, transform_indices = @transform_3, window_bounds = array<i64: 16, 1>}, {pipeline_mode = #tpu.pipeline_mode<synchronous>, transform_indices = @transform_4, window_bounds = array<i64: 9, 256>}, {transform_indices = @transform_5, window_bounds = array<i64: 2, 16, 256>}]} {
    %cst = arith.constant 0.000000e+00 : f32
    %0 = vector.broadcast %cst : f32 to vector<16x512xf32>
    %c0 = arith.constant 0 : index
    %c0_0 = arith.constant 0 : index
    %1 = vector.load %arg7[%c0, %c0_0] : memref<16x512xf32, #tpu.memory_space<vmem>>, vector<16x512xf32>
    tpu.vector_store %arg7[%c0, %c0_0], %0 {strides = array<i32>} : memref<16x512xf32, #tpu.memory_space<vmem>>, vector<16x512xf32>,
    %cst_1 = arith.constant 0.000000e+00 : bf16
    %2 = vector.broadcast %cst_1 : bf16 to vector<112x512xbf16>
    %c144 = arith.constant 144 : index
    %c0_2 = arith.constant 0 : index
    %3 = vector.load %arg8[%c144, %c0_2] : memref<256x512xbf16, #tpu.memory_space<vmem>>, vector<112x512xbf16>
    tpu.vector_store %arg8[%c144, %c0_2], %2 {strides = array<i32>} : memref<256x512xbf16, #tpu.memory_space<vmem>>, vector<112x512xbf16>,
    %c0_3 = arith.constant 0 : index
    %c0_4 = arith.constant 0 : index
    %c0_5 = arith.constant 0 : index
    %4 = vector.load %arg1[%c0_3, %c0_4, %c0_5] : memref<2x4x256xf32, #tpu.memory_space<vmem>>, vector<1x4x256xf32>
    %5 = vector.shape_cast %4 : vector<1x4x256xf32> to vector<4x256xf32>
    %c0_6 = arith.constant 0 : index
    %c128 = arith.constant 128 : index
    %6 = vector.load %arg7[%c0_6, %c128] : memref<16x512xf32, #tpu.memory_space<vmem>>, vector<4x256xf32>
    tpu.vector_store %arg7[%c0_6, %c128], %5 {strides = array<i32>} : memref<16x512xf32, #tpu.memory_space<vmem>>, vector<4x256xf32>,
    %c0_7 = arith.constant 0 : index
    %c0_8 = arith.constant 0 : index
    %7 = vector.load %arg7[%c0_7, %c0_8] : memref<16x512xf32, #tpu.memory_space<vmem>>, vector<16x512xf32>
    %8 = vector.extract_strided_slice %7 {offsets = [0, 111], sizes = [16, 256], strides = [1, 1]} : vector<16x512xf32> to vector<16x256xf32>
    %c0_9 = arith.constant 0 : index
    %c0_10 = arith.constant 0 : index
    %9 = vector.load %arg5[%c0_9, %c0_10] : memref<9x256xf32, #tpu.memory_space<vmem>>, vector<1x256xf32>
    %10 = vector.broadcast %9 : vector<1x256xf32> to vector<16x256xf32>
    %11 = arith.mulf %8, %10 : vector<16x256xf32>
    %12 = arith.truncf %11 : vector<16x256xf32> to vector<16x256xbf16>
    %c0_11 = arith.constant 0 : index
    %c0_12 = arith.constant 0 : index
    %13 = vector.load %arg8[%c0_11, %c0_12] : memref<256x512xbf16, #tpu.memory_space<vmem>>, vector<16x256xbf16>
    tpu.vector_store %arg8[%c0_11, %c0_12], %12 {strides = array<i32>} : memref<256x512xbf16, #tpu.memory_space<vmem>>, vector<16x256xbf16>,
    %14 = vector.extract_strided_slice %7 {offsets = [0, 112], sizes = [16, 256], strides = [1, 1]} : vector<16x512xf32> to vector<16x256xf32>
    %c1 = arith.constant 1 : index
    %c0_13 = arith.constant 0 : index
    %15 = vector.load %arg5[%c1, %c0_13] : memref<9x256xf32, #tpu.memory_space<vmem>>, vector<1x256xf32>
    %16 = vector.broadcast %15 : vector<1x256xf32> to vector<16x256xf32>
    %17 = arith.mulf %14, %16 : vector<16x256xf32>
    %18 = arith.truncf %17 : vector<16x256xf32> to vector<16x256xbf16>
    %c16 = arith.constant 16 : index
    %c0_14 = arith.constant 0 : index
    %19 = vector.load %arg8[%c16, %c0_14] : memref<256x512xbf16, #tpu.memory_space<vmem>>, vector<16x256xbf16>
    tpu.vector_store %arg8[%c16, %c0_14], %18 {strides = array<i32>} : memref<256x512xbf16, #tpu.memory_space<vmem>>, vector<16x256xbf16>,
    %20 = vector.extract_strided_slice %7 {offsets = [0, 113], sizes = [16, 256], strides = [1, 1]} : vector<16x512xf32> to vector<16x256xf32>
    %c2 = arith.constant 2 : index
    %c0_15 = arith.constant 0 : index
    %21 = vector.load %arg5[%c2, %c0_15] : memref<9x256xf32, #tpu.memory_space<vmem>>, vector<1x256xf32>
    %22 = vector.broadcast %21 : vector<1x256xf32> to vector<16x256xf32>
    %23 = arith.mulf %20, %22 : vector<16x256xf32>
    %24 = arith.truncf %23 : vector<16x256xf32> to vector<16x256xbf16>
    %c32 = arith.constant 32 : index
    %c0_16 = arith.constant 0 : index
    %25 = vector.load %arg8[%c32, %c0_16] : memref<256x512xbf16, #tpu.memory_space<vmem>>, vector<16x256xbf16>
    tpu.vector_store %arg8[%c32, %c0_16], %24 {strides = array<i32>} : memref<256x512xbf16, #tpu.memory_space<vmem>>, vector<16x256xbf16>,
    %26 = vector.extract_strided_slice %7 {offsets = [0, 127], sizes = [16, 256], strides = [1, 1]} : vector<16x512xf32> to vector<16x256xf32>
    %c3 = arith.constant 3 : index
    %c0_17 = arith.constant 0 : index
    %27 = vector.load %arg5[%c3, %c0_17] : memref<9x256xf32, #tpu.memory_space<vmem>>, vector<1x256xf32>
    %28 = vector.broadcast %27 : vector<1x256xf32> to vector<16x256xf32>
    %29 = arith.mulf %26, %28 : vector<16x256xf32>
    %30 = arith.truncf %29 : vector<16x256xf32> to vector<16x256xbf16>
    %c48 = arith.constant 48 : index
    %c0_18 = arith.constant 0 : index
    %31 = vector.load %arg8[%c48, %c0_18] : memref<256x512xbf16, #tpu.memory_space<vmem>>, vector<16x256xbf16>
    tpu.vector_store %arg8[%c48, %c0_18], %30 {strides = array<i32>} : memref<256x512xbf16, #tpu.memory_space<vmem>>, vector<16x256xbf16>,
    %32 = vector.extract_strided_slice %7 {offsets = [0, 128], sizes = [16, 256], strides = [1, 1]} : vector<16x512xf32> to vector<16x256xf32>
    %c4 = arith.constant 4 : index
    %c0_19 = arith.constant 0 : index
    %33 = vector.load %arg5[%c4, %c0_19] : memref<9x256xf32, #tpu.memory_space<vmem>>, vector<1x256xf32>
    %34 = vector.broadcast %33 : vector<1x256xf32> to vector<16x256xf32>
    %35 = arith.mulf %32, %34 : vector<16x256xf32>
    %36 = arith.truncf %35 : vector<16x256xf32> to vector<16x256xbf16>
    %c64 = arith.constant 64 : index
    %c0_20 = arith.constant 0 : index
    %37 = vector.load %arg8[%c64, %c0_20] : memref<256x512xbf16, #tpu.memory_space<vmem>>, vector<16x256xbf16>
    tpu.vector_store %arg8[%c64, %c0_20], %36 {strides = array<i32>} : memref<256x512xbf16, #tpu.memory_space<vmem>>, vector<16x256xbf16>,
    %38 = vector.extract_strided_slice %7 {offsets = [0, 129], sizes = [16, 256], strides = [1, 1]} : vector<16x512xf32> to vector<16x256xf32>
    %c5 = arith.constant 5 : index
    %c0_21 = arith.constant 0 : index
    %39 = vector.load %arg5[%c5, %c0_21] : memref<9x256xf32, #tpu.memory_space<vmem>>, vector<1x256xf32>
    %40 = vector.broadcast %39 : vector<1x256xf32> to vector<16x256xf32>
    %41 = arith.mulf %38, %40 : vector<16x256xf32>
    %42 = arith.truncf %41 : vector<16x256xf32> to vector<16x256xbf16>
    %c80 = arith.constant 80 : index
    %c0_22 = arith.constant 0 : index
    %43 = vector.load %arg8[%c80, %c0_22] : memref<256x512xbf16, #tpu.memory_space<vmem>>, vector<16x256xbf16>
    tpu.vector_store %arg8[%c80, %c0_22], %42 {strides = array<i32>} : memref<256x512xbf16, #tpu.memory_space<vmem>>, vector<16x256xbf16>,
    %44 = vector.extract_strided_slice %7 {offsets = [0, 143], sizes = [16, 256], strides = [1, 1]} : vector<16x512xf32> to vector<16x256xf32>
    %c6 = arith.constant 6 : index
    %c0_23 = arith.constant 0 : index
    %45 = vector.load %arg5[%c6, %c0_23] : memref<9x256xf32, #tpu.memory_space<vmem>>, vector<1x256xf32>
    %46 = vector.broadcast %45 : vector<1x256xf32> to vector<16x256xf32>
    %47 = arith.mulf %44, %46 : vector<16x256xf32>
    %48 = arith.truncf %47 : vector<16x256xf32> to vector<16x256xbf16>
    %c96 = arith.constant 96 : index
    %c0_24 = arith.constant 0 : index
    %49 = vector.load %arg8[%c96, %c0_24] : memref<256x512xbf16, #tpu.memory_space<vmem>>, vector<16x256xbf16>
    tpu.vector_store %arg8[%c96, %c0_24], %48 {strides = array<i32>} : memref<256x512xbf16, #tpu.memory_space<vmem>>, vector<16x256xbf16>,
    %50 = vector.extract_strided_slice %7 {offsets = [0, 144], sizes = [16, 256], strides = [1, 1]} : vector<16x512xf32> to vector<16x256xf32>
    %c7 = arith.constant 7 : index
    %c0_25 = arith.constant 0 : index
    %51 = vector.load %arg5[%c7, %c0_25] : memref<9x256xf32, #tpu.memory_space<vmem>>, vector<1x256xf32>
    %52 = vector.broadcast %51 : vector<1x256xf32> to vector<16x256xf32>
    %53 = arith.mulf %50, %52 : vector<16x256xf32>
    %54 = arith.truncf %53 : vector<16x256xf32> to vector<16x256xbf16>
    %c112 = arith.constant 112 : index
    %c0_26 = arith.constant 0 : index
    %55 = vector.load %arg8[%c112, %c0_26] : memref<256x512xbf16, #tpu.memory_space<vmem>>, vector<16x256xbf16>
    tpu.vector_store %arg8[%c112, %c0_26], %54 {strides = array<i32>} : memref<256x512xbf16, #tpu.memory_space<vmem>>, vector<16x256xbf16>,
    %56 = vector.extract_strided_slice %7 {offsets = [0, 145], sizes = [16, 256], strides = [1, 1]} : vector<16x512xf32> to vector<16x256xf32>
    %c8 = arith.constant 8 : index
    %c0_27 = arith.constant 0 : index
    %57 = vector.load %arg5[%c8, %c0_27] : memref<9x256xf32, #tpu.memory_space<vmem>>, vector<1x256xf32>
    %58 = vector.broadcast %57 : vector<1x256xf32> to vector<16x256xf32>
    %59 = arith.mulf %56, %58 : vector<16x256xf32>
    %60 = arith.truncf %59 : vector<16x256xf32> to vector<16x256xbf16>
    %c128_28 = arith.constant 128 : index
    %c0_29 = arith.constant 0 : index
    %61 = vector.load %arg8[%c128_28, %c0_29] : memref<256x512xbf16, #tpu.memory_space<vmem>>, vector<16x256xbf16>
    tpu.vector_store %arg8[%c128_28, %c0_29], %60 {strides = array<i32>} : memref<256x512xbf16, #tpu.memory_space<vmem>>, vector<16x256xbf16>,
    %c1_30 = arith.constant 1 : index
    %c0_31 = arith.constant 0 : index
    %c0_32 = arith.constant 0 : index
    %62 = vector.load %arg1[%c1_30, %c0_31, %c0_32] : memref<2x4x256xf32, #tpu.memory_space<vmem>>, vector<1x4x256xf32>
    %63 = vector.shape_cast %62 : vector<1x4x256xf32> to vector<4x256xf32>
    %c0_33 = arith.constant 0 : index
    %c128_34 = arith.constant 128 : index
    %64 = vector.load %arg7[%c0_33, %c128_34] : memref<16x512xf32, #tpu.memory_space<vmem>>, vector<4x256xf32>
    tpu.vector_store %arg7[%c0_33, %c128_34], %63 {strides = array<i32>} : memref<16x512xf32, #tpu.memory_space<vmem>>, vector<4x256xf32>,
    %c0_35 = arith.constant 0 : index
    %c0_36 = arith.constant 0 : index
    %65 = vector.load %arg7[%c0_35, %c0_36] : memref<16x512xf32, #tpu.memory_space<vmem>>, vector<16x512xf32>
    %66 = vector.extract_strided_slice %65 {offsets = [0, 111], sizes = [16, 256], strides = [1, 1]} : vector<16x512xf32> to vector<16x256xf32>
    %c0_37 = arith.constant 0 : index
    %c0_38 = arith.constant 0 : index
    %67 = vector.load %arg5[%c0_37, %c0_38] : memref<9x256xf32, #tpu.memory_space<vmem>>, vector<1x256xf32>
    %68 = vector.broadcast %67 : vector<1x256xf32> to vector<16x256xf32>
    %69 = arith.mulf %66, %68 : vector<16x256xf32>
    %70 = arith.truncf %69 : vector<16x256xf32> to vector<16x256xbf16>
    %c0_39 = arith.constant 0 : index
    %c256 = arith.constant 256 : index
    %71 = vector.load %arg8[%c0_39, %c256] : memref<256x512xbf16, #tpu.memory_space<vmem>>, vector<16x256xbf16>
    tpu.vector_store %arg8[%c0_39, %c256], %70 {strides = array<i32>} : memref<256x512xbf16, #tpu.memory_space<vmem>>, vector<16x256xbf16>,
    %72 = vector.extract_strided_slice %65 {offsets = [0, 112], sizes = [16, 256], strides = [1, 1]} : vector<16x512xf32> to vector<16x256xf32>
    %c1_40 = arith.constant 1 : index
    %c0_41 = arith.constant 0 : index
    %73 = vector.load %arg5[%c1_40, %c0_41] : memref<9x256xf32, #tpu.memory_space<vmem>>, vector<1x256xf32>
    %74 = vector.broadcast %73 : vector<1x256xf32> to vector<16x256xf32>
    %75 = arith.mulf %72, %74 : vector<16x256xf32>
    %76 = arith.truncf %75 : vector<16x256xf32> to vector<16x256xbf16>
    %c16_42 = arith.constant 16 : index
    %c256_43 = arith.constant 256 : index
    %77 = vector.load %arg8[%c16_42, %c256_43] : memref<256x512xbf16, #tpu.memory_space<vmem>>, vector<16x256xbf16>
    tpu.vector_store %arg8[%c16_42, %c256_43], %76 {strides = array<i32>} : memref<256x512xbf16, #tpu.memory_space<vmem>>, vector<16x256xbf16>,
    %78 = vector.extract_strided_slice %65 {offsets = [0, 113], sizes = [16, 256], strides = [1, 1]} : vector<16x512xf32> to vector<16x256xf32>
    %c2_44 = arith.constant 2 : index
    %c0_45 = arith.constant 0 : index
    %79 = vector.load %arg5[%c2_44, %c0_45] : memref<9x256xf32, #tpu.memory_space<vmem>>, vector<1x256xf32>
    %80 = vector.broadcast %79 : vector<1x256xf32> to vector<16x256xf32>
    %81 = arith.mulf %78, %80 : vector<16x256xf32>
    %82 = arith.truncf %81 : vector<16x256xf32> to vector<16x256xbf16>
    %c32_46 = arith.constant 32 : index
    %c256_47 = arith.constant 256 : index
    %83 = vector.load %arg8[%c32_46, %c256_47] : memref<256x512xbf16, #tpu.memory_space<vmem>>, vector<16x256xbf16>
    tpu.vector_store %arg8[%c32_46, %c256_47], %82 {strides = array<i32>} : memref<256x512xbf16, #tpu.memory_space<vmem>>, vector<16x256xbf16>,
    %84 = vector.extract_strided_slice %65 {offsets = [0, 127], sizes = [16, 256], strides = [1, 1]} : vector<16x512xf32> to vector<16x256xf32>
    %c3_48 = arith.constant 3 : index
    %c0_49 = arith.constant 0 : index
    %85 = vector.load %arg5[%c3_48, %c0_49] : memref<9x256xf32, #tpu.memory_space<vmem>>, vector<1x256xf32>
    %86 = vector.broadcast %85 : vector<1x256xf32> to vector<16x256xf32>
    %87 = arith.mulf %84, %86 : vector<16x256xf32>
    %88 = arith.truncf %87 : vector<16x256xf32> to vector<16x256xbf16>
    %c48_50 = arith.constant 48 : index
    %c256_51 = arith.constant 256 : index
    %89 = vector.load %arg8[%c48_50, %c256_51] : memref<256x512xbf16, #tpu.memory_space<vmem>>, vector<16x256xbf16>
    tpu.vector_store %arg8[%c48_50, %c256_51], %88 {strides = array<i32>} : memref<256x512xbf16, #tpu.memory_space<vmem>>, vector<16x256xbf16>,
    %90 = vector.extract_strided_slice %65 {offsets = [0, 128], sizes = [16, 256], strides = [1, 1]} : vector<16x512xf32> to vector<16x256xf32>
    %c4_52 = arith.constant 4 : index
    %c0_53 = arith.constant 0 : index
    %91 = vector.load %arg5[%c4_52, %c0_53] : memref<9x256xf32, #tpu.memory_space<vmem>>, vector<1x256xf32>
    %92 = vector.broadcast %91 : vector<1x256xf32> to vector<16x256xf32>
    %93 = arith.mulf %90, %92 : vector<16x256xf32>
    %94 = arith.truncf %93 : vector<16x256xf32> to vector<16x256xbf16>
    %c64_54 = arith.constant 64 : index
    %c256_55 = arith.constant 256 : index
    %95 = vector.load %arg8[%c64_54, %c256_55] : memref<256x512xbf16, #tpu.memory_space<vmem>>, vector<16x256xbf16>
    tpu.vector_store %arg8[%c64_54, %c256_55], %94 {strides = array<i32>} : memref<256x512xbf16, #tpu.memory_space<vmem>>, vector<16x256xbf16>,
    %96 = vector.extract_strided_slice %65 {offsets = [0, 129], sizes = [16, 256], strides = [1, 1]} : vector<16x512xf32> to vector<16x256xf32>
    %c5_56 = arith.constant 5 : index
    %c0_57 = arith.constant 0 : index
    %97 = vector.load %arg5[%c5_56, %c0_57] : memref<9x256xf32, #tpu.memory_space<vmem>>, vector<1x256xf32>
    %98 = vector.broadcast %97 : vector<1x256xf32> to vector<16x256xf32>
    %99 = arith.mulf %96, %98 : vector<16x256xf32>
    %100 = arith.truncf %99 : vector<16x256xf32> to vector<16x256xbf16>
    %c80_58 = arith.constant 80 : index
    %c256_59 = arith.constant 256 : index
    %101 = vector.load %arg8[%c80_58, %c256_59] : memref<256x512xbf16, #tpu.memory_space<vmem>>, vector<16x256xbf16>
    tpu.vector_store %arg8[%c80_58, %c256_59], %100 {strides = array<i32>} : memref<256x512xbf16, #tpu.memory_space<vmem>>, vector<16x256xbf16>,
    %102 = vector.extract_strided_slice %65 {offsets = [0, 143], sizes = [16, 256], strides = [1, 1]} : vector<16x512xf32> to vector<16x256xf32>
    %c6_60 = arith.constant 6 : index
    %c0_61 = arith.constant 0 : index
    %103 = vector.load %arg5[%c6_60, %c0_61] : memref<9x256xf32, #tpu.memory_space<vmem>>, vector<1x256xf32>
    %104 = vector.broadcast %103 : vector<1x256xf32> to vector<16x256xf32>
    %105 = arith.mulf %102, %104 : vector<16x256xf32>
    %106 = arith.truncf %105 : vector<16x256xf32> to vector<16x256xbf16>
    %c96_62 = arith.constant 96 : index
    %c256_63 = arith.constant 256 : index
    %107 = vector.load %arg8[%c96_62, %c256_63] : memref<256x512xbf16, #tpu.memory_space<vmem>>, vector<16x256xbf16>
    tpu.vector_store %arg8[%c96_62, %c256_63], %106 {strides = array<i32>} : memref<256x512xbf16, #tpu.memory_space<vmem>>, vector<16x256xbf16>,
    %108 = vector.extract_strided_slice %65 {offsets = [0, 144], sizes = [16, 256], strides = [1, 1]} : vector<16x512xf32> to vector<16x256xf32>
    %c7_64 = arith.constant 7 : index
    %c0_65 = arith.constant 0 : index
    %109 = vector.load %arg5[%c7_64, %c0_65] : memref<9x256xf32, #tpu.memory_space<vmem>>, vector<1x256xf32>
    %110 = vector.broadcast %109 : vector<1x256xf32> to vector<16x256xf32>
    %111 = arith.mulf %108, %110 : vector<16x256xf32>
    %112 = arith.truncf %111 : vector<16x256xf32> to vector<16x256xbf16>
    %c112_66 = arith.constant 112 : index
    %c256_67 = arith.constant 256 : index
    %113 = vector.load %arg8[%c112_66, %c256_67] : memref<256x512xbf16, #tpu.memory_space<vmem>>, vector<16x256xbf16>
    tpu.vector_store %arg8[%c112_66, %c256_67], %112 {strides = array<i32>} : memref<256x512xbf16, #tpu.memory_space<vmem>>, vector<16x256xbf16>,
    %114 = vector.extract_strided_slice %65 {offsets = [0, 145], sizes = [16, 256], strides = [1, 1]} : vector<16x512xf32> to vector<16x256xf32>
    %c8_68 = arith.constant 8 : index
    %c0_69 = arith.constant 0 : index
    %115 = vector.load %arg5[%c8_68, %c0_69] : memref<9x256xf32, #tpu.memory_space<vmem>>, vector<1x256xf32>
    %116 = vector.broadcast %115 : vector<1x256xf32> to vector<16x256xf32>
    %117 = arith.mulf %114, %116 : vector<16x256xf32>
    %118 = arith.truncf %117 : vector<16x256xf32> to vector<16x256xbf16>
    %c128_70 = arith.constant 128 : index
    %c256_71 = arith.constant 256 : index
    %119 = vector.load %arg8[%c128_70, %c256_71] : memref<256x512xbf16, #tpu.memory_space<vmem>>, vector<16x256xbf16>
    tpu.vector_store %arg8[%c128_70, %c256_71], %118 {strides = array<i32>} : memref<256x512xbf16, #tpu.memory_space<vmem>>, vector<16x256xbf16>,
    %c0_72 = arith.constant 0 : index
    %c0_73 = arith.constant 0 : index
    %120 = vector.load %arg2[%c0_72, %c0_73] : memref<16x256xbf16, #tpu.memory_space<vmem>>, vector<16x256xbf16>
    %c0_74 = arith.constant 0 : index
    %c0_75 = arith.constant 0 : index
    %121 = vector.load %arg8[%c0_74, %c0_75] : memref<256x512xbf16, #tpu.memory_space<vmem>>, vector<256x512xbf16>
    %cst_76 = arith.constant dense<0.000000e+00> : vector<16x512xf32>
    %122 = tpu.matmul %120, %121, %cst_76 {dimension_numbers = #tpu.dot_dimension_numbers<[1], [0], [0], [1], [0, 0, 1, 1], [], []>} : vector<16x256xbf16>, vector<256x512xbf16>, vector<16x512xf32> -> vector<16x512xf32>
    %c0_77 = arith.constant 0 : index
    %c0_78 = arith.constant 0 : index
    %123 = vector.load %arg3[%c0_77, %c0_78] : memref<16x1xf32, #tpu.memory_space<vmem>>, vector<16x1xf32>
    %124 = vector.broadcast %123 : vector<16x1xf32> to vector<16x512xf32>
    %125 = arith.mulf %122, %124 : vector<16x512xf32>
    %c0_79 = arith.constant 0 : index
    %c0_80 = arith.constant 0 : index
    %126 = vector.load %arg4[%c0_79, %c0_80] : memref<16x1xf32, #tpu.memory_space<vmem>>, vector<16x1xf32>
    %127 = vector.broadcast %126 : vector<16x1xf32> to vector<16x512xf32>
    %128 = arith.addf %125, %127 : vector<16x512xf32>
    %cst_81 = arith.constant 0.000000e+00 : f32
    %129 = vector.broadcast %cst_81 : f32 to vector<16x512xf32>
    %130 = arith.maximumf %128, %129 : vector<16x512xf32>
    %131 = vector.extract_strided_slice %130 {offsets = [0, 0], sizes = [16, 256], strides = [1, 1]} : vector<16x512xf32> to vector<16x256xf32>
    %c0_82 = arith.constant 0 : index
    %c0_83 = arith.constant 0 : index
    %c0_84 = arith.constant 0 : index
    %132 = vector.load %arg6[%c0_82, %c0_83, %c0_84] : memref<2x16x256xf32, #tpu.memory_space<vmem>>, vector<1x16x256xf32>
    %133 = vector.shape_cast %132 : vector<1x16x256xf32> to vector<16x256xf32>
    %134 = vector.shape_cast %131 : vector<16x256xf32> to vector<1x16x256xf32>
    tpu.vector_store %arg6[%c0_82, %c0_83, %c0_84], %134 {strides = array<i32>} : memref<2x16x256xf32, #tpu.memory_space<vmem>>, vector<1x16x256xf32>,
    %135 = vector.extract_strided_slice %130 {offsets = [0, 256], sizes = [16, 256], strides = [1, 1]} : vector<16x512xf32> to vector<16x256xf32>
    %c1_85 = arith.constant 1 : index
    %c0_86 = arith.constant 0 : index
    %c0_87 = arith.constant 0 : index
    %136 = vector.load %arg6[%c1_85, %c0_86, %c0_87] : memref<2x16x256xf32, #tpu.memory_space<vmem>>, vector<1x16x256xf32>
    %137 = vector.shape_cast %136 : vector<1x16x256xf32> to vector<16x256xf32>
    %138 = vector.shape_cast %135 : vector<16x256xf32> to vector<1x16x256xf32>
    tpu.vector_store %arg6[%c1_85, %c0_86, %c0_87], %138 {strides = array<i32>} : memref<2x16x256xf32, #tpu.memory_space<vmem>>, vector<1x16x256xf32>,
    return
  }
  func.func @transform_0(%arg0: i32) -> (i32, i32, i32) {
    %c0_i32 = arith.constant 0 : i32
    %c0_i32_0 = arith.constant 0 : i32
    %c0_i32_1 = arith.constant 0 : i32
    return %arg0, %c0_i32, %c0_i32_0 : i32, i32, i32
  }
  func.func @transform_1(%arg0: i32) -> (i32, i32) {
    %c0_i32 = arith.constant 0 : i32
    %c0_i32_0 = arith.constant 0 : i32
    %c0_i32_1 = arith.constant 0 : i32
    return %c0_i32, %c0_i32_0 : i32, i32
  }
  func.func @transform_2(%arg0: i32) -> (i32, i32) {
    %c0_i32 = arith.constant 0 : i32
    %c0_i32_0 = arith.constant 0 : i32
    %c0_i32_1 = arith.constant 0 : i32
    return %c0_i32, %c0_i32_0 : i32, i32
  }
  func.func @transform_3(%arg0: i32) -> (i32, i32) {
    %c0_i32 = arith.constant 0 : i32
    %c0_i32_0 = arith.constant 0 : i32
    %c0_i32_1 = arith.constant 0 : i32
    return %c0_i32, %c0_i32_0 : i32, i32
  }
  func.func @transform_4(%arg0: i32) -> (i32, i32) {
    %c0_i32 = arith.constant 0 : i32
    %c0_i32_0 = arith.constant 0 : i32
    %c0_i32_1 = arith.constant 0 : i32
    return %c0_i32, %c0_i32_0 : i32, i32
  }
  func.func @transform_5(%arg0: i32) -> (i32, i32, i32) {
    %c0_i32 = arith.constant 0 : i32
    %c0_i32_0 = arith.constant 0 : i32
    %c0_i32_1 = arith.constant 0 : i32
    return %arg0, %c0_i32, %c0_i32_0 : i32, i32, i32
  }
}

</mosaic_0001>

<llo_original>
// kernel: conv_bn_relu.1
$region0: #{conv_bn_relu.1}
  #allocation0 [shape = 'u32[]', space=smem, size = 0x4, offset = 0x4, fixed_abs, tag = 'smem constant byte address 0x4 - core index']
  #allocation1 [shape = 'u32[144,128]{1,0:T(1,128)}', space=vmem, size = 0x12000, scoped, tag = 'internal scratch']
  #allocation2 [shape = 'f32[16,512]{1,0:T(8,128)}', space=vmem, size = 0x8000, scoped, tag = 'scratch operand']
  #allocation3 [shape = 'bf16[256,512]{1,0:T(8,128)(2,1)}', space=vmem, size = 0x40000, scoped, tag = 'scratch operand']
  %s0 = inlined_call_operand.vmem [shape: f32[2,4,256], index: 0, kind: input, shape index: {}]
  %s1 = inlined_call_operand.vmem [shape: bf16[16,256], index: 1, kind: input, shape index: {}]
  %s2 = inlined_call_operand.vmem [shape: f32[16,1], index: 2, kind: input, shape index: {}]
  %s3 = inlined_call_operand.vmem [shape: f32[16,1], index: 3, kind: input, shape index: {}]
  %s4 = inlined_call_operand.vmem [shape: f32[9,256], index: 4, kind: input, shape index: {}]
  %s5 = inlined_call_operand.vmem [shape: f32[2,16,256], index: 5, kind: output, shape index: {}]
  %s6 = sld [smem:[#allocation0]]
  $region30: #{conv_bn_relu.1} parent=0
    _
  %s8 = ssub.s32 1, %s6
  %s9 = scalar_select 0, %s8, %s6
  // Predicated region
  $region2: #{conv_bn_relu.1} parent=0 // pred_check
    _
  $region3: #{conv_bn_relu.1} parent=0 // pred_check_branch
    %11 = sbr.rel (0) target = $region5
  $region4: #{conv_bn_relu.1} parent=0 // pred_region
    _
  $region5: #{conv_bn_relu.1} parent=0 // pred_fallthru
    _
  // Predicated region
  $region6: #{conv_bn_relu.1} parent=0 // pred_check
    _
  $region7: #{conv_bn_relu.1} parent=0 // pred_check_branch
    %13 = sbr.rel (0) target = $region9
  $region8: #{conv_bn_relu.1} parent=0 // pred_region
    _
  $region9: #{conv_bn_relu.1} parent=0 // pred_fallthru
    _
  // Predicated region
  $region10: #{conv_bn_relu.1} parent=0 // pred_check
    _
  $region11: #{conv_bn_relu.1} parent=0 // pred_check_branch
    %15 = sbr.rel (0) target = $region13
  $region12: #{conv_bn_relu.1} parent=0 // pred_region
    _
  $region13: #{conv_bn_relu.1} parent=0 // pred_fallthru
    _
  // Predicated region
  $region14: #{conv_bn_relu.1} parent=0 // pred_check
    _
  $region15: #{conv_bn_relu.1} parent=0 // pred_check_branch
    %17 = sbr.rel (0) target = $region17
  $region16: #{conv_bn_relu.1} parent=0 // pred_region
    _
  $region17: #{conv_bn_relu.1} parent=0 // pred_fallthru
    _
  // Predicated region
  $region18: #{conv_bn_relu.1} parent=0 // pred_check
    _
  $region19: #{conv_bn_relu.1} parent=0 // pred_check_branch
    %19 = sbr.rel (0) target = $region21
  $region20: #{conv_bn_relu.1} parent=0 // pred_region
    _
  $region21: #{conv_bn_relu.1} parent=0 // pred_fallthru
    _
  %21 = vst [vmem:[#allocation2] sm:$0xff] 0.0
  %22 = vst [vmem:[#allocation2 + $0x8] sm:$0xff] 0.0
  %23 = vst [vmem:[#allocation2 + $0x10] sm:$0xff] 0.0
  %24 = vst [vmem:[#allocation2 + $0x18] sm:$0xff] 0.0
  %25 = vst [vmem:[#allocation2 + $0x20] sm:$0xff] 0.0
  %26 = vst [vmem:[#allocation2 + $0x28] sm:$0xff] 0.0
  %27 = vst [vmem:[#allocation2 + $0x30] sm:$0xff] 0.0
  %28 = vst [vmem:[#allocation2 + $0x38] sm:$0xff] 0.0
  %29 = vst [vmem:[#allocation3 + $0x120] sm:$0xff] 0
  %30 = vst [vmem:[#allocation3 + $0x128] sm:$0xff] 0
  %31 = vst [vmem:[#allocation3 + $0x130] sm:$0xff] 0
  %32 = vst [vmem:[#allocation3 + $0x138] sm:$0xff] 0
  %33 = vst [vmem:[#allocation3 + $0x140] sm:$0xff] 0
  %34 = vst [vmem:[#allocation3 + $0x148] sm:$0xff] 0
  %35 = vst [vmem:[#allocation3 + $0x150] sm:$0xff] 0
  %36 = vst [vmem:[#allocation3 + $0x158] sm:$0xff] 0
  %37 = vst [vmem:[#allocation3 + $0x160] sm:$0xff] 0
  %38 = vst [vmem:[#allocation3 + $0x168] sm:$0xff] 0
  %39 = vst [vmem:[#allocation3 + $0x170] sm:$0xff] 0
  %40 = vst [vmem:[#allocation3 + $0x178] sm:$0xff] 0
  %41 = vst [vmem:[#allocation3 + $0x180] sm:$0xff] 0
  %42 = vst [vmem:[#allocation3 + $0x188] sm:$0xff] 0
  %43 = vst [vmem:[#allocation3 + $0x190] sm:$0xff] 0
  %44 = vst [vmem:[#allocation3 + $0x198] sm:$0xff] 0
  %45 = vst [vmem:[#allocation3 + $0x1a0] sm:$0xff] 0
  %46 = vst [vmem:[#allocation3 + $0x1a8] sm:$0xff] 0
  %47 = vst [vmem:[#allocation3 + $0x1b0] sm:$0xff] 0
  %48 = vst [vmem:[#allocation3 + $0x1b8] sm:$0xff] 0
  %49 = vst [vmem:[#allocation3 + $0x1c0] sm:$0xff] 0
  %50 = vst [vmem:[#allocation3 + $0x1c8] sm:$0xff] 0
  %51 = vst [vmem:[#allocation3 + $0x1d0] sm:$0xff] 0
  %52 = vst [vmem:[#allocation3 + $0x1d8] sm:$0xff] 0
  %53 = vst [vmem:[#allocation3 + $0x1e0] sm:$0xff] 0
  %54 = vst [vmem:[#allocation3 + $0x1e8] sm:$0xff] 0
  %55 = vst [vmem:[#allocation3 + $0x1f0] sm:$0xff] 0
  %56 = vst [vmem:[#allocation3 + $0x1f8] sm:$0xff] 0
  %v57 = vld [vmem:[%s0] sm:$0xff]
  %v59 = vcombine.high %v57, %v57
  %61 = vst [vmem:[#allocation2 + $0x8] sm:$0xf] %v57
  %62 = vst [vmem:[#allocation2 + $0x10] sm:$0xf] %v59
  %v63 = vld [vmem:[#allocation2] sm:$0xff]
  %v64 = vld [vmem:[#allocation2 + $0x8] sm:$0xff]
  %v65 = vld [vmem:[#allocation2 + $0x10] sm:$0xff]
  %v66 = vld [vmem:[#allocation2 + $0x18] sm:$0xff]
  %v67 = vld [vmem:[#allocation2 + $0x20] sm:$0xff]
  %v68 = vld [vmem:[#allocation2 + $0x28] sm:$0xff]
  %v69 = vld [vmem:[#allocation2 + $0x30] sm:$0xff]
  %v70 = vld [vmem:[#allocation2 + $0x38] sm:$0xff]
  %v71 = vld [vmem:[%s4] ss:$8 sm:$0x3]
  %v73 = vlaneseq
  %v74 = vshrl.u32 %v73, 7
  %v75 = vsub.s32 0, %v74
  %v76 = vrot.slane %v71, %v75
  %v77 = vlaneseq
  %v78 = vshrl.u32 %v77, 7
  %v79 = vsub.s32 1, %v78
  %v80 = vrot.slane %v71, %v79
  %81 = vrot.lane.b32.xlu0 %v76, 111
  %v82 = vpop.permute.xlu0 %81
  %83 = vrot.lane.b32.xlu0 %v80, 111
  %v84 = vpop.permute.xlu0 %83
  %vm85 = vcmask 908288
  %v86 = vsel %vm85, %v82, %v84
  %v90 = vmul.f32 %v63, %v82
  %v91 = vmul.f32 %v64, %v86
  %v92 = vmul.f32 %v65, %v84
  %v93 = vmul.f32 %v67, %v82
  %v94 = vmul.f32 %v68, %v86
  %v95 = vmul.f32 %v69, %v84
  %v96 = vpack.c.bf16 %v93, %v90
  %v97 = vpack.c.bf16 %v94, %v91
  %v98 = vpack.c.bf16 %v95, %v92
  %v102 = vunpack.c.l.b16 %v96
  %v103 = vunpack.c.l.b16 %v97
  %v104 = vunpack.c.l.b16 %v98
  %v105 = vunpack.c.h.b16 %v96
  %v106 = vunpack.c.h.b16 %v97
  %v107 = vunpack.c.h.b16 %v98
  %v108 = vpack.c.b16 %v103, %v102
  %v109 = vpack.c.b16 %v104, %v104
  %v110 = vpack.c.b16 %v106, %v105
  %v111 = vpack.c.b16 %v107, %v107
  %112 = vrot.lane.b32.xlu0 %v108, 17
  %v113 = vpop.permute.xlu0 %112
  %114 = vrot.lane.b32.xlu0 %v109, 17
  %v115 = vpop.permute.xlu0 %114
  %116 = vrot.lane.b32.xlu0 %v110, 17
  %v117 = vpop.permute.xlu0 %116
  %118 = vrot.lane.b32.xlu0 %v111, 17
  %v119 = vpop.permute.xlu0 %118
  %v120 = vrot.slane %v113, 4
  %v121 = vrot.slane %v115, 4
  %v122 = vrot.slane %v117, 4
  %v123 = vrot.slane %v119, 4
  %vm124 = vcmask 1043456
  %v125 = vsel %vm124, %v120, %v121
  %vm126 = vcmask 138240
  %v127 = vsel %vm126, %v113, %v125
  %v128 = vsel %vm124, %v122, %v123
  %v129 = vsel %vm126, %v117, %v128
  %132 = vst [vmem:[#allocation3] sm:$0xff] %v127
  %133 = vst [vmem:[#allocation3 + $0x10] sm:$0xff] %v129
  %s134 = scalar_lea.vmem %s4, 1
  %v135 = vld [vmem:[%s134] ss:$8 sm:$0x3]
  %v137 = vlaneseq
  %v138 = vshrl.u32 %v137, 7
  %v139 = vsub.s32 0, %v138
  %v140 = vrot.slane %v135, %v139
  %v141 = vlaneseq
  %v142 = vshrl.u32 %v141, 7
  %v143 = vsub.s32 1, %v142
  %v144 = vrot.slane %v135, %v143
  %145 = vrot.lane.b32.xlu0 %v140, 112
  %v146 = vpop.permute.xlu0 %145
  %147 = vrot.lane.b32.xlu0 %v144, 112
  %v148 = vpop.permute.xlu0 %147
  %vm149 = vcmask 916480
  %v150 = vsel %vm149, %v146, %v148
  %v154 = vmul.f32 %v63, %v146
  %v155 = vmul.f32 %v64, %v150
  %v156 = vmul.f32 %v65, %v148
  %v157 = vmul.f32 %v67, %v146
  %v158 = vmul.f32 %v68, %v150
  %v159 = vmul.f32 %v69, %v148
  %v160 = vpack.c.bf16 %v157, %v154
  %v161 = vpack.c.bf16 %v158, %v155
  %v162 = vpack.c.bf16 %v159, %v156
  %v166 = vunpack.c.l.b16 %v160
  %v167 = vunpack.c.l.b16 %v161
  %v168 = vunpack.c.l.b16 %v162
  %v169 = vunpack.c.h.b16 %v160
  %v170 = vunpack.c.h.b16 %v161
  %v171 = vunpack.c.h.b16 %v162
  %v172 = vpack.c.b16 %v167, %v166
  %v173 = vpack.c.b16 %v168, %v168
  %v174 = vpack.c.b16 %v170, %v169
  %v175 = vpack.c.b16 %v171, %v171
  %176 = vrot.lane.b32.xlu0 %v172, 16
  %v177 = vpop.permute.xlu0 %176
  %178 = vrot.lane.b32.xlu0 %v173, 16
  %v179 = vpop.permute.xlu0 %178
  %180 = vrot.lane.b32.xlu0 %v174, 16
  %v181 = vpop.permute.xlu0 %180
  %182 = vrot.lane.b32.xlu0 %v175, 16
  %v183 = vpop.permute.xlu0 %182
  %v184 = vrot.slane %v177, 4
  %v185 = vrot.slane %v179, 4
  %v186 = vrot.slane %v181, 4
  %v187 = vrot.slane %v183, 4
  %v188 = vsel %vm124, %v184, %v185
  %vm189 = vcmask 130048
  %v190 = vsel %vm189, %v177, %v188
  %v191 = vsel %vm124, %v186, %v187
  %v192 = vsel %vm189, %v181, %v191
  %195 = vst [vmem:[#allocation3 + $0x20] sm:$0xff] %v190
  %196 = vst [vmem:[#allocation3 + $0x30] sm:$0xff] %v192
  %s197 = scalar_lea.vmem %s4, 2
  %v198 = vld [vmem:[%s197] ss:$8 sm:$0x3]
  %v200 = vlaneseq
  %v201 = vshrl.u32 %v200, 7
  %v202 = vsub.s32 0, %v201
  %v203 = vrot.slane %v198, %v202
  %v204 = vlaneseq
  %v205 = vshrl.u32 %v204, 7
  %v206 = vsub.s32 1, %v205
  %v207 = vrot.slane %v198, %v206
  %208 = vrot.lane.b32.xlu0 %v203, 113
  %v209 = vpop.permute.xlu0 %208
  %210 = vrot.lane.b32.xlu0 %v207, 113
  %v211 = vpop.permute.xlu0 %210
  %vm212 = vcmask 924672
  %v213 = vsel %vm212, %v209, %v211
  %v217 = vmul.f32 %v63, %v209
  %v218 = vmul.f32 %v64, %v213
  %v219 = vmul.f32 %v65, %v211
  %v220 = vmul.f32 %v67, %v209
  %v221 = vmul.f32 %v68, %v213
  %v222 = vmul.f32 %v69, %v211
  %v223 = vpack.c.bf16 %v220, %v217
  %v224 = vpack.c.bf16 %v221, %v218
  %v225 = vpack.c.bf16 %v222, %v219
  %v229 = vunpack.c.l.b16 %v223
  %v230 = vunpack.c.l.b16 %v224
  %v231 = vunpack.c.l.b16 %v225
  %v232 = vunpack.c.h.b16 %v223
  %v233 = vunpack.c.h.b16 %v224
  %v234 = vunpack.c.h.b16 %v225
  %v235 = vpack.c.b16 %v230, %v229
  %v236 = vpack.c.b16 %v231, %v231
  %v237 = vpack.c.b16 %v233, %v232
  %v238 = vpack.c.b16 %v234, %v234
  %239 = vrot.lane.b32.xlu0 %v235, 15
  %v240 = vpop.permute.xlu0 %239
  %241 = vrot.lane.b32.xlu0 %v236, 15
  %v242 = vpop.permute.xlu0 %241
  %243 = vrot.lane.b32.xlu0 %v237, 15
  %v244 = vpop.permute.xlu0 %243
  %245 = vrot.lane.b32.xlu0 %v238, 15
  %v246 = vpop.permute.xlu0 %245
  %v247 = vrot.slane %v240, 4
  %v248 = vrot.slane %v242, 4
  %v249 = vrot.slane %v244, 4
  %v250 = vrot.slane %v246, 4
  %v251 = vsel %vm124, %v247, %v248
  %vm252 = vcmask 121856
  %v253 = vsel %vm252, %v240, %v251
  %v254 = vsel %vm124, %v249, %v250
  %v255 = vsel %vm252, %v244, %v254
  %258 = vst [vmem:[#allocation3 + $0x40] sm:$0xff] %v253
  %259 = vst [vmem:[#allocation3 + $0x50] sm:$0xff] %v255
  %s260 = scalar_lea.vmem %s4, 3
  %v261 = vld [vmem:[%s260] ss:$8 sm:$0x3]
  %v263 = vlaneseq
  %v264 = vshrl.u32 %v263, 7
  %v265 = vsub.s32 0, %v264
  %v266 = vrot.slane %v261, %v265
  %v267 = vlaneseq
  %v268 = vshrl.u32 %v267, 7
  %v269 = vsub.s32 1, %v268
  %v270 = vrot.slane %v261, %v269
  %271 = vrot.lane.b32.xlu0 %v266, 127
  %v272 = vpop.permute.xlu0 %271
  %273 = vrot.lane.b32.xlu0 %v270, 127
  %v274 = vpop.permute.xlu0 %273
  %vm275 = vcmask 1039360
  %v276 = vsel %vm275, %v272, %v274
  %v280 = vmul.f32 %v63, %v272
  %v281 = vmul.f32 %v64, %v276
  %v282 = vmul.f32 %v65, %v274
  %v283 = vmul.f32 %v67, %v272
  %v284 = vmul.f32 %v68, %v276
  %v285 = vmul.f32 %v69, %v274
  %v286 = vpack.c.bf16 %v283, %v280
  %v287 = vpack.c.bf16 %v284, %v281
  %v288 = vpack.c.bf16 %v285, %v282
  %v292 = vunpack.c.l.b16 %v286
  %v293 = vunpack.c.l.b16 %v287
  %v294 = vunpack.c.l.b16 %v288
  %v295 = vunpack.c.h.b16 %v286
  %v296 = vunpack.c.h.b16 %v287
  %v297 = vunpack.c.h.b16 %v288
  %v298 = vpack.c.b16 %v293, %v292
  %v299 = vpack.c.b16 %v294, %v294
  %v300 = vpack.c.b16 %v296, %v295
  %v301 = vpack.c.b16 %v297, %v297
  %302 = vrot.lane.b32.xlu0 %v298, 1
  %v303 = vpop.permute.xlu0 %302
  %304 = vrot.lane.b32.xlu0 %v299, 1
  %v305 = vpop.permute.xlu0 %304
  %306 = vrot.lane.b32.xlu0 %v300, 1
  %v307 = vpop.permute.xlu0 %306
  %308 = vrot.lane.b32.xlu0 %v301, 1
  %v309 = vpop.permute.xlu0 %308
  %v310 = vrot.slane %v303, 4
  %v311 = vrot.slane %v305, 4
  %v312 = vrot.slane %v307, 4
  %v313 = vrot.slane %v309, 4
  %v314 = vsel %vm124, %v310, %v311
  %vm315 = vcmask 7168
  %v316 = vsel %vm315, %v303, %v314
  %v317 = vsel %vm124, %v312, %v313
  %v318 = vsel %vm315, %v307, %v317
  %321 = vst [vmem:[#allocation3 + $0x60] sm:$0xff] %v316
  %322 = vst [vmem:[#allocation3 + $0x70] sm:$0xff] %v318
  %s323 = scalar_lea.vmem %s4, 4
  %v324 = vld [vmem:[%s323] ss:$8 sm:$0x3]
  %v326 = vlaneseq
  %v327 = vshrl.u32 %v326, 7
  %v328 = vsub.s32 0, %v327
  %v329 = vrot.slane %v324, %v328
  %v330 = vlaneseq
  %v331 = vshrl.u32 %v330, 7
  %v332 = vsub.s32 1, %v331
  %v333 = vrot.slane %v324, %v332
  %v336 = vmul.f32 %v64, %v329
  %v337 = vmul.f32 %v65, %v333
  %v338 = vmul.f32 %v68, %v329
  %v339 = vmul.f32 %v69, %v333
  %v340 = vpack.c.bf16 %v338, %v336
  %v341 = vpack.c.bf16 %v339, %v337
  %v344 = vunpack.c.l.b16 %v340
  %v345 = vunpack.c.l.b16 %v341
  %v346 = vunpack.c.h.b16 %v340
  %v347 = vunpack.c.h.b16 %v341
  %v348 = vpack.c.b16 %v345, %v344
  %v349 = vpack.c.b16 %v347, %v346
  %352 = vst [vmem:[#allocation3 + $0x80] sm:$0xff] %v348
  %353 = vst [vmem:[#allocation3 + $0x90] sm:$0xff] %v349
  %s354 = scalar_lea.vmem %s4, 5
  %v355 = vld [vmem:[%s354] ss:$8 sm:$0x3]
  %v357 = vlaneseq
  %v358 = vshrl.u32 %v357, 7
  %v359 = vsub.s32 0, %v358
  %v360 = vrot.slane %v355, %v359
  %v361 = vlaneseq
  %v362 = vshrl.u32 %v361, 7
  %v363 = vsub.s32 1, %v362
  %v364 = vrot.slane %v355, %v363
  %365 = vrot.lane.b32.xlu0 %v360, 1
  %v366 = vpop.permute.xlu0 %365
  %367 = vrot.lane.b32.xlu0 %v364, 1
  %v368 = vpop.permute.xlu0 %367
  %vm369 = vcmask 7168
  %v370 = vsel %vm369, %v366, %v368
  %v374 = vmul.f32 %v64, %v366
  %v375 = vmul.f32 %v65, %v370
  %v376 = vmul.f32 %v66, %v368
  %v377 = vmul.f32 %v68, %v366
  %v378 = vmul.f32 %v69, %v370
  %v379 = vmul.f32 %v70, %v368
  %v380 = vpack.c.bf16 %v377, %v374
  %v381 = vpack.c.bf16 %v378, %v375
  %v382 = vpack.c.bf16 %v379, %v376
  %v386 = vunpack.c.l.b16 %v380
  %v387 = vunpack.c.l.b16 %v381
  %v388 = vunpack.c.l.b16 %v382
  %v389 = vunpack.c.h.b16 %v380
  %v390 = vunpack.c.h.b16 %v381
  %v391 = vunpack.c.h.b16 %v382
  %v392 = vpack.c.b16 %v387, %v386
  %v393 = vpack.c.b16 %v388, %v388
  %v394 = vpack.c.b16 %v390, %v389
  %v395 = vpack.c.b16 %v391, %v391
  %396 = vrot.lane.b32.xlu0 %v392, 127
  %v397 = vpop.permute.xlu0 %396
  %398 = vrot.lane.b32.xlu0 %v393, 127
  %v399 = vpop.permute.xlu0 %398
  %400 = vrot.lane.b32.xlu0 %v394, 127
  %v401 = vpop.permute.xlu0 %400
  %402 = vrot.lane.b32.xlu0 %v395, 127
  %v403 = vpop.permute.xlu0 %402
  %v404 = vrot.slane %v397, 4
  %v405 = vrot.slane %v399, 4
  %v406 = vrot.slane %v401, 4
  %v407 = vrot.slane %v403, 4
  %v408 = vsel %vm124, %v404, %v405
  %vm409 = vcmask 1039360
  %v410 = vsel %vm409, %v397, %v408
  %v411 = vsel %vm124, %v406, %v407
  %v412 = vsel %vm409, %v401, %v411
  %415 = vst [vmem:[#allocation3 + $0xa0] sm:$0xff] %v410
  %416 = vst [vmem:[#allocation3 + $0xb0] sm:$0xff] %v412
  %s417 = scalar_lea.vmem %s4, 6
  %v418 = vld [vmem:[%s417] ss:$8 sm:$0x3]
  %v420 = vlaneseq
  %v421 = vshrl.u32 %v420, 7
  %v422 = vsub.s32 0, %v421
  %v423 = vrot.slane %v418, %v422
  %v424 = vlaneseq
  %v425 = vshrl.u32 %v424, 7
  %v426 = vsub.s32 1, %v425
  %v427 = vrot.slane %v418, %v426
  %428 = vrot.lane.b32.xlu0 %v423, 15
  %v429 = vpop.permute.xlu0 %428
  %430 = vrot.lane.b32.xlu0 %v427, 15
  %v431 = vpop.permute.xlu0 %430
  %vm432 = vcmask 121856
  %v433 = vsel %vm432, %v429, %v431
  %v437 = vmul.f32 %v64, %v429
  %v438 = vmul.f32 %v65, %v433
  %v439 = vmul.f32 %v66, %v431
  %v440 = vmul.f32 %v68, %v429
  %v441 = vmul.f32 %v69, %v433
  %v442 = vmul.f32 %v70, %v431
  %v443 = vpack.c.bf16 %v440, %v437
  %v444 = vpack.c.bf16 %v441, %v438
  %v445 = vpack.c.bf16 %v442, %v439
  %v449 = vunpack.c.l.b16 %v443
  %v450 = vunpack.c.l.b16 %v444
  %v451 = vunpack.c.l.b16 %v445
  %v452 = vunpack.c.h.b16 %v443
  %v453 = vunpack.c.h.b16 %v444
  %v454 = vunpack.c.h.b16 %v445
  %v455 = vpack.c.b16 %v450, %v449
  %v456 = vpack.c.b16 %v451, %v451
  %v457 = vpack.c.b16 %v453, %v452
  %v458 = vpack.c.b16 %v454, %v454
  %459 = vrot.lane.b32.xlu0 %v455, 113
  %v460 = vpop.permute.xlu0 %459
  %461 = vrot.lane.b32.xlu0 %v456, 113
  %v462 = vpop.permute.xlu0 %461
  %463 = vrot.lane.b32.xlu0 %v457, 113
  %v464 = vpop.permute.xlu0 %463
  %465 = vrot.lane.b32.xlu0 %v458, 113
  %v466 = vpop.permute.xlu0 %465
  %v467 = vrot.slane %v460, 4
  %v468 = vrot.slane %v462, 4
  %v469 = vrot.slane %v464, 4
  %v470 = vrot.slane %v466, 4
  %v471 = vsel %vm124, %v467, %v468
  %vm472 = vcmask 924672
  %v473 = vsel %vm472, %v460, %v471
  %v474 = vsel %vm124, %v469, %v470
  %v475 = vsel %vm472, %v464, %v474
  %478 = vst [vmem:[#allocation3 + $0xc0] sm:$0xff] %v473
  %479 = vst [vmem:[#allocation3 + $0xd0] sm:$0xff] %v475
  %s480 = scalar_lea.vmem %s4, 7
  %v481 = vld [vmem:[%s480] ss:$8 sm:$0x3]
  %v483 = vlaneseq
  %v484 = vshrl.u32 %v483, 7
  %v485 = vsub.s32 0, %v484
  %v486 = vrot.slane %v481, %v485
  %v487 = vlaneseq
  %v488 = vshrl.u32 %v487, 7
  %v489 = vsub.s32 1, %v488
  %v490 = vrot.slane %v481, %v489
  %491 = vrot.lane.b32.xlu0 %v486, 16
  %v492 = vpop.permute.xlu0 %491
  %493 = vrot.lane.b32.xlu0 %v490, 16
  %v494 = vpop.permute.xlu0 %493
  %vm495 = vcmask 130048
  %v496 = vsel %vm495, %v492, %v494
  %v500 = vmul.f32 %v64, %v492
  %v501 = vmul.f32 %v65, %v496
  %v502 = vmul.f32 %v66, %v494
  %v503 = vmul.f32 %v68, %v492
  %v504 = vmul.f32 %v69, %v496
  %v505 = vmul.f32 %v70, %v494
  %v506 = vpack.c.bf16 %v503, %v500
  %v507 = vpack.c.bf16 %v504, %v501
  %v508 = vpack.c.bf16 %v505, %v502
  %v512 = vunpack.c.l.b16 %v506
  %v513 = vunpack.c.l.b16 %v507
  %v514 = vunpack.c.l.b16 %v508
  %v515 = vunpack.c.h.b16 %v506
  %v516 = vunpack.c.h.b16 %v507
  %v517 = vunpack.c.h.b16 %v508
  %v518 = vpack.c.b16 %v513, %v512
  %v519 = vpack.c.b16 %v514, %v514
  %v520 = vpack.c.b16 %v516, %v515
  %v521 = vpack.c.b16 %v517, %v517
  %522 = vrot.lane.b32.xlu0 %v518, 112
  %v523 = vpop.permute.xlu0 %522
  %524 = vrot.lane.b32.xlu0 %v519, 112
  %v525 = vpop.permute.xlu0 %524
  %526 = vrot.lane.b32.xlu0 %v520, 112
  %v527 = vpop.permute.xlu0 %526
  %528 = vrot.lane.b32.xlu0 %v521, 112
  %v529 = vpop.permute.xlu0 %528
  %v530 = vrot.slane %v523, 4
  %v531 = vrot.slane %v525, 4
  %v532 = vrot.slane %v527, 4
  %v533 = vrot.slane %v529, 4
  %v534 = vsel %vm124, %v530, %v531
  %vm535 = vcmask 916480
  %v536 = vsel %vm535, %v523, %v534
  %v537 = vsel %vm124, %v532, %v533
  %v538 = vsel %vm535, %v527, %v537
  %541 = vst [vmem:[#allocation3 + $0xe0] sm:$0xff] %v536
  %542 = vst [vmem:[#allocation3 + $0xf0] sm:$0xff] %v538
  %s543 = scalar_lea.vmem %s4, 16
  %v544 = vld [vmem:[%s543] ss:$8 sm:$0x3]
  %v546 = vlaneseq
  %v547 = vshrl.u32 %v546, 7
  %v548 = vsub.s32 0, %v547
  %v549 = vrot.slane %v544, %v548
  %v550 = vlaneseq
  %v551 = vshrl.u32 %v550, 7
  %v552 = vsub.s32 1, %v551
  %v553 = vrot.slane %v544, %v552
  %554 = vrot.lane.b32.xlu0 %v549, 17
  %v555 = vpop.permute.xlu0 %554
  %556 = vrot.lane.b32.xlu0 %v553, 17
  %v557 = vpop.permute.xlu0 %556
  %vm558 = vcmask 138240
  %v559 = vsel %vm558, %v555, %v557
  %v563 = vmul.f32 %v64, %v555
  %v564 = vmul.f32 %v65, %v559
  %v565 = vmul.f32 %v66, %v557
  %v566 = vmul.f32 %v68, %v555
  %v567 = vmul.f32 %v69, %v559
  %v568 = vmul.f32 %v70, %v557
  %v569 = vpack.c.bf16 %v566, %v563
  %v570 = vpack.c.bf16 %v567, %v564
  %v571 = vpack.c.bf16 %v568, %v565
  %v575 = vunpack.c.l.b16 %v569
  %v576 = vunpack.c.l.b16 %v570
  %v577 = vunpack.c.l.b16 %v571
  %v578 = vunpack.c.h.b16 %v569
  %v579 = vunpack.c.h.b16 %v570
  %v580 = vunpack.c.h.b16 %v571
  %v581 = vpack.c.b16 %v576, %v575
  %v582 = vpack.c.b16 %v577, %v577
  %v583 = vpack.c.b16 %v579, %v578
  %v584 = vpack.c.b16 %v580, %v580
  %585 = vrot.lane.b32.xlu0 %v581, 111
  %v586 = vpop.permute.xlu0 %585
  %587 = vrot.lane.b32.xlu0 %v582, 111
  %v588 = vpop.permute.xlu0 %587
  %589 = vrot.lane.b32.xlu0 %v583, 111
  %v590 = vpop.permute.xlu0 %589
  %591 = vrot.lane.b32.xlu0 %v584, 111
  %v592 = vpop.permute.xlu0 %591
  %v593 = vrot.slane %v586, 4
  %v594 = vrot.slane %v588, 4
  %v595 = vrot.slane %v590, 4
  %v596 = vrot.slane %v592, 4
  %v597 = vsel %vm124, %v593, %v594
  %vm598 = vcmask 908288
  %v599 = vsel %vm598, %v586, %v597
  %v600 = vsel %vm124, %v595, %v596
  %v601 = vsel %vm598, %v590, %v600
  %604 = vst [vmem:[#allocation3 + $0x100] sm:$0xff] %v599
  %605 = vst [vmem:[#allocation3 + $0x110] sm:$0xff] %v601
  %s606 = scalar_lea.vmem %s0, 8
  %v607 = vld [vmem:[%s606] sm:$0xff]
  %v609 = vcombine.high %v607, %v607
  %611 = vst [vmem:[#allocation2 + $0x8] sm:$0xf] %v607
  %612 = vst [vmem:[#allocation2 + $0x10] sm:$0xf] %v609
  %v613 = vld [vmem:[#allocation2] sm:$0xff]
  %v614 = vld [vmem:[#allocation2 + $0x8] sm:$0xff]
  %v615 = vld [vmem:[#allocation2 + $0x10] sm:$0xff]
  %v616 = vld [vmem:[#allocation2 + $0x18] sm:$0xff]
  %v617 = vld [vmem:[#allocation2 + $0x20] sm:$0xff]
  %v618 = vld [vmem:[#allocation2 + $0x28] sm:$0xff]
  %v619 = vld [vmem:[#allocation2 + $0x30] sm:$0xff]
  %v620 = vld [vmem:[#allocation2 + $0x38] sm:$0xff]
  %v621 = vld [vmem:[%s4] ss:$8 sm:$0x3]
  %v623 = vlaneseq
  %v624 = vshrl.u32 %v623, 7
  %v625 = vsub.s32 0, %v624
  %v626 = vrot.slane %v621, %v625
  %v627 = vlaneseq
  %v628 = vshrl.u32 %v627, 7
  %v629 = vsub.s32 1, %v628
  %v630 = vrot.slane %v621, %v629
  %631 = vrot.lane.b32.xlu0 %v626, 111
  %v632 = vpop.permute.xlu0 %631
  %633 = vrot.lane.b32.xlu0 %v630, 111
  %v634 = vpop.permute.xlu0 %633
  %v635 = vsel %vm85, %v632, %v634
  %v639 = vmul.f32 %v613, %v632
  %v640 = vmul.f32 %v614, %v635
  %v641 = vmul.f32 %v615, %v634
  %v642 = vmul.f32 %v617, %v632
  %v643 = vmul.f32 %v618, %v635
  %v644 = vmul.f32 %v619, %v634
  %v645 = vpack.c.bf16 %v642, %v639
  %v646 = vpack.c.bf16 %v643, %v640
  %v647 = vpack.c.bf16 %v644, %v641
  %v651 = vunpack.c.l.b16 %v645
  %v652 = vunpack.c.l.b16 %v646
  %v653 = vunpack.c.l.b16 %v647
  %v654 = vunpack.c.h.b16 %v645
  %v655 = vunpack.c.h.b16 %v646
  %v656 = vunpack.c.h.b16 %v647
  %v657 = vpack.c.b16 %v652, %v651
  %v658 = vpack.c.b16 %v653, %v653
  %v659 = vpack.c.b16 %v655, %v654
  %v660 = vpack.c.b16 %v656, %v656
  %661 = vrot.lane.b32.xlu0 %v657, 17
  %v662 = vpop.permute.xlu0 %661
  %663 = vrot.lane.b32.xlu0 %v658, 17
  %v664 = vpop.permute.xlu0 %663
  %665 = vrot.lane.b32.xlu0 %v659, 17
  %v666 = vpop.permute.xlu0 %665
  %667 = vrot.lane.b32.xlu0 %v660, 17
  %v668 = vpop.permute.xlu0 %667
  %v669 = vrot.slane %v662, 4
  %v670 = vrot.slane %v664, 4
  %v671 = vrot.slane %v666, 4
  %v672 = vrot.slane %v668, 4
  %v673 = vsel %vm124, %v669, %v670
  %v674 = vsel %vm126, %v662, %v673
  %v675 = vsel %vm124, %v671, %v672
  %v676 = vsel %vm126, %v666, %v675
  %679 = vst [vmem:[#allocation3 + $0x8] sm:$0xff] %v674
  %680 = vst [vmem:[#allocation3 + $0x18] sm:$0xff] %v676
  %v681 = vld [vmem:[%s134] ss:$8 sm:$0x3]
  %v683 = vlaneseq
  %v684 = vshrl.u32 %v683, 7
  %v685 = vsub.s32 0, %v684
  %v686 = vrot.slane %v681, %v685
  %v687 = vlaneseq
  %v688 = vshrl.u32 %v687, 7
  %v689 = vsub.s32 1, %v688
  %v690 = vrot.slane %v681, %v689
  %691 = vrot.lane.b32.xlu0 %v686, 112
  %v692 = vpop.permute.xlu0 %691
  %693 = vrot.lane.b32.xlu0 %v690, 112
  %v694 = vpop.permute.xlu0 %693
  %v695 = vsel %vm149, %v692, %v694
  %v699 = vmul.f32 %v613, %v692
  %v700 = vmul.f32 %v614, %v695
  %v701 = vmul.f32 %v615, %v694
  %v702 = vmul.f32 %v617, %v692
  %v703 = vmul.f32 %v618, %v695
  %v704 = vmul.f32 %v619, %v694
  %v705 = vpack.c.bf16 %v702, %v699
  %v706 = vpack.c.bf16 %v703, %v700
  %v707 = vpack.c.bf16 %v704, %v701
  %v711 = vunpack.c.l.b16 %v705
  %v712 = vunpack.c.l.b16 %v706
  %v713 = vunpack.c.l.b16 %v707
  %v714 = vunpack.c.h.b16 %v705
  %v715 = vunpack.c.h.b16 %v706
  %v716 = vunpack.c.h.b16 %v707
  %v717 = vpack.c.b16 %v712, %v711
  %v718 = vpack.c.b16 %v713, %v713
  %v719 = vpack.c.b16 %v715, %v714
  %v720 = vpack.c.b16 %v716, %v716
  %721 = vrot.lane.b32.xlu0 %v717, 16
  %v722 = vpop.permute.xlu0 %721
  %723 = vrot.lane.b32.xlu0 %v718, 16
  %v724 = vpop.permute.xlu0 %723
  %725 = vrot.lane.b32.xlu0 %v719, 16
  %v726 = vpop.permute.xlu0 %725
  %727 = vrot.lane.b32.xlu0 %v720, 16
  %v728 = vpop.permute.xlu0 %727
  %v729 = vrot.slane %v722, 4
  %v730 = vrot.slane %v724, 4
  %v731 = vrot.slane %v726, 4
  %v732 = vrot.slane %v728, 4
  %v733 = vsel %vm124, %v729, %v730
  %v734 = vsel %vm189, %v722, %v733
  %v735 = vsel %vm124, %v731, %v732
  %v736 = vsel %vm189, %v726, %v735
  %739 = vst [vmem:[#allocation3 + $0x28] sm:$0xff] %v734
  %740 = vst [vmem:[#allocation3 + $0x38] sm:$0xff] %v736
  %v741 = vld [vmem:[%s197] ss:$8 sm:$0x3]
  %v743 = vlaneseq
  %v744 = vshrl.u32 %v743, 7
  %v745 = vsub.s32 0, %v744
  %v746 = vrot.slane %v741, %v745
  %v747 = vlaneseq
  %v748 = vshrl.u32 %v747, 7
  %v749 = vsub.s32 1, %v748
  %v750 = vrot.slane %v741, %v749
  %751 = vrot.lane.b32.xlu0 %v746, 113
  %v752 = vpop.permute.xlu0 %751
  %753 = vrot.lane.b32.xlu0 %v750, 113
  %v754 = vpop.permute.xlu0 %753
  %v755 = vsel %vm212, %v752, %v754
  %v759 = vmul.f32 %v613, %v752
  %v760 = vmul.f32 %v614, %v755
  %v761 = vmul.f32 %v615, %v754
  %v762 = vmul.f32 %v617, %v752
  %v763 = vmul.f32 %v618, %v755
  %v764 = vmul.f32 %v619, %v754
  %v765 = vpack.c.bf16 %v762, %v759
  %v766 = vpack.c.bf16 %v763, %v760
  %v767 = vpack.c.bf16 %v764, %v761
  %v771 = vunpack.c.l.b16 %v765
  %v772 = vunpack.c.l.b16 %v766
  %v773 = vunpack.c.l.b16 %v767
  %v774 = vunpack.c.h.b16 %v765
  %v775 = vunpack.c.h.b16 %v766
  %v776 = vunpack.c.h.b16 %v767
  %v777 = vpack.c.b16 %v772, %v771
  %v778 = vpack.c.b16 %v773, %v773
  %v779 = vpack.c.b16 %v775, %v774
  %v780 = vpack.c.b16 %v776, %v776
  %781 = vrot.lane.b32.xlu0 %v777, 15
  %v782 = vpop.permute.xlu0 %781
  %783 = vrot.lane.b32.xlu0 %v778, 15
  %v784 = vpop.permute.xlu0 %783
  %785 = vrot.lane.b32.xlu0 %v779, 15
  %v786 = vpop.permute.xlu0 %785
  %787 = vrot.lane.b32.xlu0 %v780, 15
  %v788 = vpop.permute.xlu0 %787
  %v789 = vrot.slane %v782, 4
  %v790 = vrot.slane %v784, 4
  %v791 = vrot.slane %v786, 4
  %v792 = vrot.slane %v788, 4
  %v793 = vsel %vm124, %v789, %v790
  %v794 = vsel %vm252, %v782, %v793
  %v795 = vsel %vm124, %v791, %v792
  %v796 = vsel %vm252, %v786, %v795
  %799 = vst [vmem:[#allocation3 + $0x48] sm:$0xff] %v794
  %800 = vst [vmem:[#allocation3 + $0x58] sm:$0xff] %v796
  %v801 = vld [vmem:[%s260] ss:$8 sm:$0x3]
  %v803 = vlaneseq
  %v804 = vshrl.u32 %v803, 7
  %v805 = vsub.s32 0, %v804
  %v806 = vrot.slane %v801, %v805
  %v807 = vlaneseq
  %v808 = vshrl.u32 %v807, 7
  %v809 = vsub.s32 1, %v808
  %v810 = vrot.slane %v801, %v809
  %811 = vrot.lane.b32.xlu0 %v806, 127
  %v812 = vpop.permute.xlu0 %811
  %813 = vrot.lane.b32.xlu0 %v810, 127
  %v814 = vpop.permute.xlu0 %813
  %v815 = vsel %vm275, %v812, %v814
  %v819 = vmul.f32 %v613, %v812
  %v820 = vmul.f32 %v614, %v815
  %v821 = vmul.f32 %v615, %v814
  %v822 = vmul.f32 %v617, %v812
  %v823 = vmul.f32 %v618, %v815
  %v824 = vmul.f32 %v619, %v814
  %v825 = vpack.c.bf16 %v822, %v819
  %v826 = vpack.c.bf16 %v823, %v820
  %v827 = vpack.c.bf16 %v824, %v821
  %v831 = vunpack.c.l.b16 %v825
  %v832 = vunpack.c.l.b16 %v826
  %v833 = vunpack.c.l.b16 %v827
  %v834 = vunpack.c.h.b16 %v825
  %v835 = vunpack.c.h.b16 %v826
  %v836 = vunpack.c.h.b16 %v827
  %v837 = vpack.c.b16 %v832, %v831
  %v838 = vpack.c.b16 %v833, %v833
  %v839 = vpack.c.b16 %v835, %v834
  %v840 = vpack.c.b16 %v836, %v836
  %841 = vrot.lane.b32.xlu0 %v837, 1
  %v842 = vpop.permute.xlu0 %841
  %843 = vrot.lane.b32.xlu0 %v838, 1
  %v844 = vpop.permute.xlu0 %843
  %845 = vrot.lane.b32.xlu0 %v839, 1
  %v846 = vpop.permute.xlu0 %845
  %847 = vrot.lane.b32.xlu0 %v840, 1
  %v848 = vpop.permute.xlu0 %847
  %v849 = vrot.slane %v842, 4
  %v850 = vrot.slane %v844, 4
  %v851 = vrot.slane %v846, 4
  %v852 = vrot.slane %v848, 4
  %v853 = vsel %vm124, %v849, %v850
  %v854 = vsel %vm315, %v842, %v853
  %v855 = vsel %vm124, %v851, %v852
  %v856 = vsel %vm315, %v846, %v855
  %859 = vst [vmem:[#allocation3 + $0x68] sm:$0xff] %v854
  %860 = vst [vmem:[#allocation3 + $0x78] sm:$0xff] %v856
  %v861 = vld [vmem:[%s323] ss:$8 sm:$0x3]
  %v863 = vlaneseq
  %v864 = vshrl.u32 %v863, 7
  %v865 = vsub.s32 0, %v864
  %v866 = vrot.slane %v861, %v865
  %v867 = vlaneseq
  %v868 = vshrl.u32 %v867, 7
  %v869 = vsub.s32 1, %v868
  %v870 = vrot.slane %v861, %v869
  %v873 = vmul.f32 %v614, %v866
  %v874 = vmul.f32 %v615, %v870
  %v875 = vmul.f32 %v618, %v866
  %v876 = vmul.f32 %v619, %v870
  %v877 = vpack.c.bf16 %v875, %v873
  %v878 = vpack.c.bf16 %v876, %v874
  %v881 = vunpack.c.l.b16 %v877
  %v882 = vunpack.c.l.b16 %v878
  %v883 = vunpack.c.h.b16 %v877
  %v884 = vunpack.c.h.b16 %v878
  %v885 = vpack.c.b16 %v882, %v881
  %v886 = vpack.c.b16 %v884, %v883
  %889 = vst [vmem:[#allocation3 + $0x88] sm:$0xff] %v885
  %890 = vst [vmem:[#allocation3 + $0x98] sm:$0xff] %v886
  %v891 = vld [vmem:[%s354] ss:$8 sm:$0x3]
  %v893 = vlaneseq
  %v894 = vshrl.u32 %v893, 7
  %v895 = vsub.s32 0, %v894
  %v896 = vrot.slane %v891, %v895
  %v897 = vlaneseq
  %v898 = vshrl.u32 %v897, 7
  %v899 = vsub.s32 1, %v898
  %v900 = vrot.slane %v891, %v899
  %901 = vrot.lane.b32.xlu0 %v896, 1
  %v902 = vpop.permute.xlu0 %901
  %903 = vrot.lane.b32.xlu0 %v900, 1
  %v904 = vpop.permute.xlu0 %903
  %v905 = vsel %vm369, %v902, %v904
  %v909 = vmul.f32 %v614, %v902
  %v910 = vmul.f32 %v615, %v905
  %v911 = vmul.f32 %v616, %v904
  %v912 = vmul.f32 %v618, %v902
  %v913 = vmul.f32 %v619, %v905
  %v914 = vmul.f32 %v620, %v904
  %v915 = vpack.c.bf16 %v912, %v909
  %v916 = vpack.c.bf16 %v913, %v910
  %v917 = vpack.c.bf16 %v914, %v911
  %v921 = vunpack.c.l.b16 %v915
  %v922 = vunpack.c.l.b16 %v916
  %v923 = vunpack.c.l.b16 %v917
  %v924 = vunpack.c.h.b16 %v915
  %v925 = vunpack.c.h.b16 %v916
  %v926 = vunpack.c.h.b16 %v917
  %v927 = vpack.c.b16 %v922, %v921
  %v928 = vpack.c.b16 %v923, %v923
  %v929 = vpack.c.b16 %v925, %v924
  %v930 = vpack.c.b16 %v926, %v926
  %931 = vrot.lane.b32.xlu0 %v927, 127
  %v932 = vpop.permute.xlu0 %931
  %933 = vrot.lane.b32.xlu0 %v928, 127
  %v934 = vpop.permute.xlu0 %933
  %935 = vrot.lane.b32.xlu0 %v929, 127
  %v936 = vpop.permute.xlu0 %935
  %937 = vrot.lane.b32.xlu0 %v930, 127
  %v938 = vpop.permute.xlu0 %937
  %v939 = vrot.slane %v932, 4
  %v940 = vrot.slane %v934, 4
  %v941 = vrot.slane %v936, 4
  %v942 = vrot.slane %v938, 4
  %v943 = vsel %vm124, %v939, %v940
  %v944 = vsel %vm409, %v932, %v943
  %v945 = vsel %vm124, %v941, %v942
  %v946 = vsel %vm409, %v936, %v945
  %949 = vst [vmem:[#allocation3 + $0xa8] sm:$0xff] %v944
  %950 = vst [vmem:[#allocation3 + $0xb8] sm:$0xff] %v946
  %v951 = vld [vmem:[%s417] ss:$8 sm:$0x3]
  %v953 = vlaneseq
  %v954 = vshrl.u32 %v953, 7
  %v955 = vsub.s32 0, %v954
  %v956 = vrot.slane %v951, %v955
  %v957 = vlaneseq
  %v958 = vshrl.u32 %v957, 7
  %v959 = vsub.s32 1, %v958
  %v960 = vrot.slane %v951, %v959
  %961 = vrot.lane.b32.xlu0 %v956, 15
  %v962 = vpop.permute.xlu0 %961
  %963 = vrot.lane.b32.xlu0 %v960, 15
  %v964 = vpop.permute.xlu0 %963
  %v965 = vsel %vm432, %v962, %v964
  %v969 = vmul.f32 %v614, %v962
  %v970 = vmul.f32 %v615, %v965
  %v971 = vmul.f32 %v616, %v964
  %v972 = vmul.f32 %v618, %v962
  %v973 = vmul.f32 %v619, %v965
  %v974 = vmul.f32 %v620, %v964
  %v975 = vpack.c.bf16 %v972, %v969
  %v976 = vpack.c.bf16 %v973, %v970
  %v977 = vpack.c.bf16 %v974, %v971
  %v981 = vunpack.c.l.b16 %v975
  %v982 = vunpack.c.l.b16 %v976
  %v983 = vunpack.c.l.b16 %v977
  %v984 = vunpack.c.h.b16 %v975
  %v985 = vunpack.c.h.b16 %v976
  %v986 = vunpack.c.h.b16 %v977
  %v987 = vpack.c.b16 %v982, %v981
  %v988 = vpack.c.b16 %v983, %v983
  %v989 = vpack.c.b16 %v985, %v984
  %v990 = vpack.c.b16 %v986, %v986
  %991 = vrot.lane.b32.xlu0 %v987, 113
  %v992 = vpop.permute.xlu0 %991
  %993 = vrot.lane.b32.xlu0 %v988, 113
  %v994 = vpop.permute.xlu0 %993
  %995 = vrot.lane.b32.xlu0 %v989, 113
  %v996 = vpop.permute.xlu0 %995
  %997 = vrot.lane.b32.xlu0 %v990, 113
  %v998 = vpop.permute.xlu0 %997
  %v999 = vrot.slane %v992, 4
  %v1000 = vrot.slane %v994, 4
  %v1001 = vrot.slane %v996, 4
  %v1002 = vrot.slane %v998, 4
  %v1003 = vsel %vm124, %v999, %v1000
  %v1004 = vsel %vm472, %v992, %v1003
  %v1005 = vsel %vm124, %v1001, %v1002
  %v1006 = vsel %vm472, %v996, %v1005
  %1009 = vst [vmem:[#allocation3 + $0xc8] sm:$0xff] %v1004
  %1010 = vst [vmem:[#allocation3 + $0xd8] sm:$0xff] %v1006
  %v1011 = vld [vmem:[%s480] ss:$8 sm:$0x3]
  %v1013 = vlaneseq
  %v1014 = vshrl.u32 %v1013, 7
  %v1015 = vsub.s32 0, %v1014
  %v1016 = vrot.slane %v1011, %v1015
  %v1017 = vlaneseq
  %v1018 = vshrl.u32 %v1017, 7
  %v1019 = vsub.s32 1, %v1018
  %v1020 = vrot.slane %v1011, %v1019
  %1021 = vrot.lane.b32.xlu0 %v1016, 16
  %v1022 = vpop.permute.xlu0 %1021
  %1023 = vrot.lane.b32.xlu0 %v1020, 16
  %v1024 = vpop.permute.xlu0 %1023
  %v1025 = vsel %vm495, %v1022, %v1024
  %v1029 = vmul.f32 %v614, %v1022
  %v1030 = vmul.f32 %v615, %v1025
  %v1031 = vmul.f32 %v616, %v1024
  %v1032 = vmul.f32 %v618, %v1022
  %v1033 = vmul.f32 %v619, %v1025
  %v1034 = vmul.f32 %v620, %v1024
  %v1035 = vpack.c.bf16 %v1032, %v1029
  %v1036 = vpack.c.bf16 %v1033, %v1030
  %v1037 = vpack.c.bf16 %v1034, %v1031
  %v1041 = vunpack.c.l.b16 %v1035
  %v1042 = vunpack.c.l.b16 %v1036
  %v1043 = vunpack.c.l.b16 %v1037
  %v1044 = vunpack.c.h.b16 %v1035
  %v1045 = vunpack.c.h.b16 %v1036
  %v1046 = vunpack.c.h.b16 %v1037
  %v1047 = vpack.c.b16 %v1042, %v1041
  %v1048 = vpack.c.b16 %v1043, %v1043
  %v1049 = vpack.c.b16 %v1045, %v1044
  %v1050 = vpack.c.b16 %v1046, %v1046
  %1051 = vrot.lane.b32.xlu0 %v1047, 112
  %v1052 = vpop.permute.xlu0 %1051
  %1053 = vrot.lane.b32.xlu0 %v1048, 112
  %v1054 = vpop.permute.xlu0 %1053
  %1055 = vrot.lane.b32.xlu0 %v1049, 112
  %v1056 = vpop.permute.xlu0 %1055
  %1057 = vrot.lane.b32.xlu0 %v1050, 112
  %v1058 = vpop.permute.xlu0 %1057
  %v1059 = vrot.slane %v1052, 4
  %v1060 = vrot.slane %v1054, 4
  %v1061 = vrot.slane %v1056, 4
  %v1062 = vrot.slane %v1058, 4
  %v1063 = vsel %vm124, %v1059, %v1060
  %v1064 = vsel %vm535, %v1052, %v1063
  %v1065 = vsel %vm124, %v1061, %v1062
  %v1066 = vsel %vm535, %v1056, %v1065
  %1069 = vst [vmem:[#allocation3 + $0xe8] sm:$0xff] %v1064
  %1070 = vst [vmem:[#allocation3 + $0xf8] sm:$0xff] %v1066
  %v1071 = vld [vmem:[%s543] ss:$8 sm:$0x3]
  %v1073 = vlaneseq
  %v1074 = vshrl.u32 %v1073, 7
  %v1075 = vsub.s32 0, %v1074
  %v1076 = vrot.slane %v1071, %v1075
  %v1077 = vlaneseq
  %v1078 = vshrl.u32 %v1077, 7
  %v1079 = vsub.s32 1, %v1078
  %v1080 = vrot.slane %v1071, %v1079
  %1081 = vrot.lane.b32.xlu0 %v1076, 17
  %v1082 = vpop.permute.xlu0 %1081
  %1083 = vrot.lane.b32.xlu0 %v1080, 17
  %v1084 = vpop.permute.xlu0 %1083
  %v1085 = vsel %vm558, %v1082, %v1084
  %v1089 = vmul.f32 %v614, %v1082
  %v1090 = vmul.f32 %v615, %v1085
  %v1091 = vmul.f32 %v616, %v1084
  %v1092 = vmul.f32 %v618, %v1082
  %v1093 = vmul.f32 %v619, %v1085
  %v1094 = vmul.f32 %v620, %v1084
  %v1095 = vpack.c.bf16 %v1092, %v1089
  %v1096 = vpack.c.bf16 %v1093, %v1090
  %v1097 = vpack.c.bf16 %v1094, %v1091
  %v1101 = vunpack.c.l.b16 %v1095
  %v1102 = vunpack.c.l.b16 %v1096
  %v1103 = vunpack.c.l.b16 %v1097
  %v1104 = vunpack.c.h.b16 %v1095
  %v1105 = vunpack.c.h.b16 %v1096
  %v1106 = vunpack.c.h.b16 %v1097
  %v1107 = vpack.c.b16 %v1102, %v1101
  %v1108 = vpack.c.b16 %v1103, %v1103
  %v1109 = vpack.c.b16 %v1105, %v1104
  %v1110 = vpack.c.b16 %v1106, %v1106
  %1111 = vrot.lane.b32.xlu0 %v1107, 111
  %v1112 = vpop.permute.xlu0 %1111
  %1113 = vrot.lane.b32.xlu0 %v1108, 111
  %v1114 = vpop.permute.xlu0 %1113
  %1115 = vrot.lane.b32.xlu0 %v1109, 111
  %v1116 = vpop.permute.xlu0 %1115
  %1117 = vrot.lane.b32.xlu0 %v1110, 111
  %v1118 = vpop.permute.xlu0 %1117
  %v1119 = vrot.slane %v1112, 4
  %v1120 = vrot.slane %v1114, 4
  %v1121 = vrot.slane %v1116, 4
  %v1122 = vrot.slane %v1118, 4
  %v1123 = vsel %vm124, %v1119, %v1120
  %v1124 = vsel %vm598, %v1112, %v1123
  %v1125 = vsel %vm124, %v1121, %v1122
  %v1126 = vsel %vm598, %v1116, %v1125
  %1129 = vst [vmem:[#allocation3 + $0x108] sm:$0xff] %v1124
  %1130 = vst [vmem:[#allocation3 + $0x118] sm:$0xff] %v1126
  %v1131 = vld [vmem:[%s1] sm:$0xff]
  %v1132 = vld [vmem:[%s1 + $0x8] sm:$0xff]
  %v1133 = vld [vmem:[#allocation3] sm:$0xff]
  %v1134 = vld [vmem:[#allocation3 + $0x8] sm:$0xff]
  %v1135 = vld [vmem:[#allocation3 + $0x10] sm:$0xff]
  %v1136 = vld [vmem:[#allocation3 + $0x18] sm:$0xff]
  %v1137 = vld [vmem:[#allocation3 + $0x20] sm:$0xff]
  %v1138 = vld [vmem:[#allocation3 + $0x28] sm:$0xff]
  %v1139 = vld [vmem:[#allocation3 + $0x30] sm:$0xff]
  %v1140 = vld [vmem:[#allocation3 + $0x38] sm:$0xff]
  %v1141 = vld [vmem:[#allocation3 + $0x40] sm:$0xff]
  %v1142 = vld [vmem:[#allocation3 + $0x48] sm:$0xff]
  %v1143 = vld [vmem:[#allocation3 + $0x50] sm:$0xff]
  %v1144 = vld [vmem:[#allocation3 + $0x58] sm:$0xff]
  %v1145 = vld [vmem:[#allocation3 + $0x60] sm:$0xff]
  %v1146 = vld [vmem:[#allocation3 + $0x68] sm:$0xff]
  %v1147 = vld [vmem:[#allocation3 + $0x70] sm:$0xff]
  %v1148 = vld [vmem:[#allocation3 + $0x78] sm:$0xff]
  %v1149 = vld [vmem:[#allocation3 + $0x80] sm:$0xff]
  %v1150 = vld [vmem:[#allocation3 + $0x88] sm:$0xff]
  %v1151 = vld [vmem:[#allocation3 + $0x90] sm:$0xff]
  %v1152 = vld [vmem:[#allocation3 + $0x98] sm:$0xff]
  %v1153 = vld [vmem:[#allocation3 + $0xa0] sm:$0xff]
  %v1154 = vld [vmem:[#allocation3 + $0xa8] sm:$0xff]
  %v1155 = vld [vmem:[#allocation3 + $0xb0] sm:$0xff]
  %v1156 = vld [vmem:[#allocation3 + $0xb8] sm:$0xff]
  %v1157 = vld [vmem:[#allocation3 + $0xc0] sm:$0xff]
  %v1158 = vld [vmem:[#allocation3 + $0xc8] sm:$0xff]
  %v1159 = vld [vmem:[#allocation3 + $0xd0] sm:$0xff]
  %v1160 = vld [vmem:[#allocation3 + $0xd8] sm:$0xff]
  %v1161 = vld [vmem:[#allocation3 + $0xe0] sm:$0xff]
  %v1162 = vld [vmem:[#allocation3 + $0xe8] sm:$0xff]
  %v1163 = vld [vmem:[#allocation3 + $0xf0] sm:$0xff]
  %v1164 = vld [vmem:[#allocation3 + $0xf8] sm:$0xff]
  %v1165 = vld [vmem:[#allocation3 + $0x100] sm:$0xff]
  %v1166 = vld [vmem:[#allocation3 + $0x108] sm:$0xff]
  %v1167 = vld [vmem:[#allocation3 + $0x110] sm:$0xff]
  %v1168 = vld [vmem:[#allocation3 + $0x118] sm:$0xff]
  %v1169 = vld [vmem:[#allocation3 + $0x120] sm:$0xff]
  %v1170 = vld [vmem:[#allocation3 + $0x128] sm:$0xff]
  %v1171 = vld [vmem:[#allocation3 + $0x130] sm:$0xff]
  %v1172 = vld [vmem:[#allocation3 + $0x138] sm:$0xff]
  %v1173 = vld [vmem:[#allocation3 + $0x140] sm:$0xff]
  %v1174 = vld [vmem:[#allocation3 + $0x148] sm:$0xff]
  %v1175 = vld [vmem:[#allocation3 + $0x150] sm:$0xff]
  %v1176 = vld [vmem:[#allocation3 + $0x158] sm:$0xff]
  %v1177 = vld [vmem:[#allocation3 + $0x160] sm:$0xff]
  %v1178 = vld [vmem:[#allocation3 + $0x168] sm:$0xff]
  %v1179 = vld [vmem:[#allocation3 + $0x170] sm:$0xff]
  %v1180 = vld [vmem:[#allocation3 + $0x178] sm:$0xff]
  %v1181 = vld [vmem:[#allocation3 + $0x180] sm:$0xff]
  %v1182 = vld [vmem:[#allocation3 + $0x188] sm:$0xff]
  %v1183 = vld [vmem:[#allocation3 + $0x190] sm:$0xff]
  %v1184 = vld [vmem:[#allocation3 + $0x198] sm:$0xff]
  %v1185 = vld [vmem:[#allocation3 + $0x1a0] sm:$0xff]
  %v1186 = vld [vmem:[#allocation3 + $0x1a8] sm:$0xff]
  %v1187 = vld [vmem:[#allocation3 + $0x1b0] sm:$0xff]
  %v1188 = vld [vmem:[#allocation3 + $0x1b8] sm:$0xff]
  %v1189 = vld [vmem:[#allocation3 + $0x1c0] sm:$0xff]
  %v1190 = vld [vmem:[#allocation3 + $0x1c8] sm:$0xff]
  %v1191 = vld [vmem:[#allocation3 + $0x1d0] sm:$0xff]
  %v1192 = vld [vmem:[#allocation3 + $0x1d8] sm:$0xff]
  %v1193 = vld [vmem:[#allocation3 + $0x1e0] sm:$0xff]
  %v1194 = vld [vmem:[#allocation3 + $0x1e8] sm:$0xff]
  %v1195 = vld [vmem:[#allocation3 + $0x1f0] sm:$0xff]
  %v1196 = vld [vmem:[#allocation3 + $0x1f8] sm:$0xff]
  %v1199 = vunpack.c.l.b16 %v1131
  %v1200 = vunpack.c.h.b16 %v1131
  %v1201 = vunpack.c.l.b16 %v1132
  %v1202 = vunpack.c.h.b16 %v1132
  %v1203 = vpack.c.b16 %v1201, %v1199
  %v1204 = vpack.c.b16 %v1202, %v1200
  %v1271 = vunpack.c.l.b16 %v1133
  %v1272 = vunpack.c.h.b16 %v1133
  %v1273 = vunpack.c.l.b16 %v1134
  %v1274 = vunpack.c.h.b16 %v1134
  %v1275 = vunpack.c.l.b16 %v1135
  %v1276 = vunpack.c.h.b16 %v1135
  %v1277 = vunpack.c.l.b16 %v1136
  %v1278 = vunpack.c.h.b16 %v1136
  %v1279 = vunpack.c.l.b16 %v1137
  %v1280 = vunpack.c.h.b16 %v1137
  %v1281 = vunpack.c.l.b16 %v1138
  %v1282 = vunpack.c.h.b16 %v1138
  %v1283 = vunpack.c.l.b16 %v1139
  %v1284 = vunpack.c.h.b16 %v1139
  %v1285 = vunpack.c.l.b16 %v1140
  %v1286 = vunpack.c.h.b16 %v1140
  %v1287 = vunpack.c.l.b16 %v1141
  %v1288 = vunpack.c.h.b16 %v1141
  %v1289 = vunpack.c.l.b16 %v1142
  %v1290 = vunpack.c.h.b16 %v1142
  %v1291 = vunpack.c.l.b16 %v1143
  %v1292 = vunpack.c.h.b16 %v1143
  %v1293 = vunpack.c.l.b16 %v1144
  %v1294 = vunpack.c.h.b16 %v1144
  %v1295 = vunpack.c.l.b16 %v1145
  %v1296 = vunpack.c.h.b16 %v1145
  %v1297 = vunpack.c.l.b16 %v1146
  %v1298 = vunpack.c.h.b16 %v1146
  %v1299 = vunpack.c.l.b16 %v1147
  %v1300 = vunpack.c.h.b16 %v1147
  %v1301 = vunpack.c.l.b16 %v1148
  %v1302 = vunpack.c.h.b16 %v1148
  %v1303 = vunpack.c.l.b16 %v1149
  %v1304 = vunpack.c.h.b16 %v1149
  %v1305 = vunpack.c.l.b16 %v1150
  %v1306 = vunpack.c.h.b16 %v1150
  %v1307 = vunpack.c.l.b16 %v1151
  %v1308 = vunpack.c.h.b16 %v1151
  %v1309 = vunpack.c.l.b16 %v1152
  %v1310 = vunpack.c.h.b16 %v1152
  %v1311 = vunpack.c.l.b16 %v1153
  %v1312 = vunpack.c.h.b16 %v1153
  %v1313 = vunpack.c.l.b16 %v1154
  %v1314 = vunpack.c.h.b16 %v1154
  %v1315 = vunpack.c.l.b16 %v1155
  %v1316 = vunpack.c.h.b16 %v1155
  %v1317 = vunpack.c.l.b16 %v1156
  %v1318 = vunpack.c.h.b16 %v1156
  %v1319 = vunpack.c.l.b16 %v1157
  %v1320 = vunpack.c.h.b16 %v1157
  %v1321 = vunpack.c.l.b16 %v1158
  %v1322 = vunpack.c.h.b16 %v1158
  %v1323 = vunpack.c.l.b16 %v1159
  %v1324 = vunpack.c.h.b16 %v1159
  %v1325 = vunpack.c.l.b16 %v1160
  %v1326 = vunpack.c.h.b16 %v1160
  %v1327 = vunpack.c.l.b16 %v1161
  %v1328 = vunpack.c.h.b16 %v1161
  %v1329 = vunpack.c.l.b16 %v1162
  %v1330 = vunpack.c.h.b16 %v1162
  %v1331 = vunpack.c.l.b16 %v1163
  %v1332 = vunpack.c.h.b16 %v1163
  %v1333 = vunpack.c.l.b16 %v1164
  %v1334 = vunpack.c.h.b16 %v1164
  %v1335 = vunpack.c.l.b16 %v1165
  %v1336 = vunpack.c.h.b16 %v1165
  %v1337 = vunpack.c.l.b16 %v1166
  %v1338 = vunpack.c.h.b16 %v1166
  %v1339 = vunpack.c.l.b16 %v1167
  %v1340 = vunpack.c.h.b16 %v1167
  %v1341 = vunpack.c.l.b16 %v1168
  %v1342 = vunpack.c.h.b16 %v1168
  %v1343 = vunpack.c.l.b16 %v1169
  %v1344 = vunpack.c.h.b16 %v1169
  %v1345 = vunpack.c.l.b16 %v1170
  %v1346 = vunpack.c.h.b16 %v1170
  %v1347 = vunpack.c.l.b16 %v1171
  %v1348 = vunpack.c.h.b16 %v1171
  %v1349 = vunpack.c.l.b16 %v1172
  %v1350 = vunpack.c.h.b16 %v1172
  %v1351 = vunpack.c.l.b16 %v1173
  %v1352 = vunpack.c.h.b16 %v1173
  %v1353 = vunpack.c.l.b16 %v1174
  %v1354 = vunpack.c.h.b16 %v1174
  %v1355 = vunpack.c.l.b16 %v1175
  %v1356 = vunpack.c.h.b16 %v1175
  %v1357 = vunpack.c.l.b16 %v1176
  %v1358 = vunpack.c.h.b16 %v1176
  %v1359 = vunpack.c.l.b16 %v1177
  %v1360 = vunpack.c.h.b16 %v1177
  %v1361 = vunpack.c.l.b16 %v1178
  %v1362 = vunpack.c.h.b16 %v1178
  %v1363 = vunpack.c.l.b16 %v1179
  %v1364 = vunpack.c.h.b16 %v1179
  %v1365 = vunpack.c.l.b16 %v1180
  %v1366 = vunpack.c.h.b16 %v1180
  %v1367 = vunpack.c.l.b16 %v1181
  %v1368 = vunpack.c.h.b16 %v1181
  %v1369 = vunpack.c.l.b16 %v1182
  %v1370 = vunpack.c.h.b16 %v1182
  %v1371 = vunpack.c.l.b16 %v1183
  %v1372 = vunpack.c.h.b16 %v1183
  %v1373 = vunpack.c.l.b16 %v1184
  %v1374 = vunpack.c.h.b16 %v1184
  %v1375 = vunpack.c.l.b16 %v1185
  %v1376 = vunpack.c.h.b16 %v1185
  %v1377 = vunpack.c.l.b16 %v1186
  %v1378 = vunpack.c.h.b16 %v1186
  %v1379 = vunpack.c.l.b16 %v1187
  %v1380 = vunpack.c.h.b16 %v1187
  %v1381 = vunpack.c.l.b16 %v1188
  %v1382 = vunpack.c.h.b16 %v1188
  %v1383 = vunpack.c.l.b16 %v1189
  %v1384 = vunpack.c.h.b16 %v1189
  %v1385 = vunpack.c.l.b16 %v1190
  %v1386 = vunpack.c.h.b16 %v1190
  %v1387 = vunpack.c.l.b16 %v1191
  %v1388 = vunpack.c.h.b16 %v1191
  %v1389 = vunpack.c.l.b16 %v1192
  %v1390 = vunpack.c.h.b16 %v1192
  %v1391 = vunpack.c.l.b16 %v1193
  %v1392 = vunpack.c.h.b16 %v1193
  %v1393 = vunpack.c.l.b16 %v1194
  %v1394 = vunpack.c.h.b16 %v1194
  %v1395 = vunpack.c.l.b16 %v1195
  %v1396 = vunpack.c.h.b16 %v1195
  %v1397 = vunpack.c.l.b16 %v1196
  %v1398 = vunpack.c.h.b16 %v1196
  %v1399 = vpack.c.b16 %v1275, %v1271
  %v1400 = vpack.c.b16 %v1276, %v1272
  %v1401 = vpack.c.b16 %v1277, %v1273
  %v1402 = vpack.c.b16 %v1278, %v1274
  %v1403 = vpack.c.b16 %v1283, %v1279
  %v1404 = vpack.c.b16 %v1284, %v1280
  %v1405 = vpack.c.b16 %v1285, %v1281
  %v1406 = vpack.c.b16 %v1286, %v1282
  %v1407 = vpack.c.b16 %v1291, %v1287
  %v1408 = vpack.c.b16 %v1292, %v1288
  %v1409 = vpack.c.b16 %v1293, %v1289
  %v1410 = vpack.c.b16 %v1294, %v1290
  %v1411 = vpack.c.b16 %v1299, %v1295
  %v1412 = vpack.c.b16 %v1300, %v1296
  %v1413 = vpack.c.b16 %v1301, %v1297
  %v1414 = vpack.c.b16 %v1302, %v1298
  %v1415 = vpack.c.b16 %v1307, %v1303
  %v1416 = vpack.c.b16 %v1308, %v1304
  %v1417 = vpack.c.b16 %v1309, %v1305
  %v1418 = vpack.c.b16 %v1310, %v1306
  %v1419 = vpack.c.b16 %v1315, %v1311
  %v1420 = vpack.c.b16 %v1316, %v1312
  %v1421 = vpack.c.b16 %v1317, %v1313
  %v1422 = vpack.c.b16 %v1318, %v1314
  %v1423 = vpack.c.b16 %v1323, %v1319
  %v1424 = vpack.c.b16 %v1324, %v1320
  %v1425 = vpack.c.b16 %v1325, %v1321
  %v1426 = vpack.c.b16 %v1326, %v1322
  %v1427 = vpack.c.b16 %v1331, %v1327
  %v1428 = vpack.c.b16 %v1332, %v1328
  %v1429 = vpack.c.b16 %v1333, %v1329
  %v1430 = vpack.c.b16 %v1334, %v1330
  %v1431 = vpack.c.b16 %v1339, %v1335
  %v1432 = vpack.c.b16 %v1340, %v1336
  %v1433 = vpack.c.b16 %v1341, %v1337
  %v1434 = vpack.c.b16 %v1342, %v1338
  %v1435 = vpack.c.b16 %v1347, %v1343
  %v1436 = vpack.c.b16 %v1348, %v1344
  %v1437 = vpack.c.b16 %v1349, %v1345
  %v1438 = vpack.c.b16 %v1350, %v1346
  %v1439 = vpack.c.b16 %v1355, %v1351
  %v1440 = vpack.c.b16 %v1356, %v1352
  %v1441 = vpack.c.b16 %v1357, %v1353
  %v1442 = vpack.c.b16 %v1358, %v1354
  %v1443 = vpack.c.b16 %v1363, %v1359
  %v1444 = vpack.c.b16 %v1364, %v1360
  %v1445 = vpack.c.b16 %v1365, %v1361
  %v1446 = vpack.c.b16 %v1366, %v1362
  %v1447 = vpack.c.b16 %v1371, %v1367
  %v1448 = vpack.c.b16 %v1372, %v1368
  %v1449 = vpack.c.b16 %v1373, %v1369
  %v1450 = vpack.c.b16 %v1374, %v1370
  %v1451 = vpack.c.b16 %v1379, %v1375
  %v1452 = vpack.c.b16 %v1380, %v1376
  %v1453 = vpack.c.b16 %v1381, %v1377
  %v1454 = vpack.c.b16 %v1382, %v1378
  %v1455 = vpack.c.b16 %v1387, %v1383
  %v1456 = vpack.c.b16 %v1388, %v1384
  %v1457 = vpack.c.b16 %v1389, %v1385
  %v1458 = vpack.c.b16 %v1390, %v1386
  %v1459 = vpack.c.b16 %v1395, %v1391
  %v1460 = vpack.c.b16 %v1396, %v1392
  %v1461 = vpack.c.b16 %v1397, %v1393
  %v1462 = vpack.c.b16 %v1398, %v1394
  %1527 = vmatprep.subr.bf16.mxu0 %v1428
  %1528 = vmatpush1.bf16.msra.mxu0 %v1427
  %1529 = vmatprep.subr.bf16.mxu0 %v1424
  %1530 = vmatpush1.bf16.msra.mxu0 %v1423
  %1531 = vmatprep.subr.bf16.mxu0 %v1420
  %1532 = vmatpush1.bf16.msra.mxu0 %v1419
  %1533 = vmatprep.subr.bf16.mxu0 %v1416
  %1534 = vmatpush1.bf16.msra.mxu0 %v1415
  %1535 = vmatprep.subr.bf16.mxu0 %v1412
  %1536 = vmatpush1.bf16.msra.mxu0 %v1411
  %1537 = vmatprep.subr.bf16.mxu0 %v1408
  %1538 = vmatpush1.bf16.msra.mxu0 %v1407
  %1539 = vmatprep.subr.bf16.mxu0 %v1404
  %1540 = vmatpush1.bf16.msra.mxu0 %v1403
  %1541 = vmatprep.subr.bf16.mxu0 %v1400
  %1542 = vmatpush1.bf16.msra.mxu0 %v1399
  %1543 = vmatprep.subr.bf16.mxu0 %v1460
  %1544 = vmatpush2.bf16.msra.mxu0 %v1459
  %1545 = vmatprep.subr.bf16.mxu0 %v1456
  %1546 = vmatpush2.bf16.msra.mxu0 %v1455
  %1547 = vmatprep.subr.bf16.mxu0 %v1452
  %1548 = vmatpush2.bf16.msra.mxu0 %v1451
  %1549 = vmatprep.subr.bf16.mxu0 %v1448
  %1550 = vmatpush2.bf16.msra.mxu0 %v1447
  %1551 = vmatprep.subr.bf16.mxu0 %v1444
  %1552 = vmatpush2.bf16.msra.mxu0 %v1443
  %1553 = vmatprep.subr.bf16.mxu0 %v1440
  %1554 = vmatpush2.bf16.msra.mxu0 %v1439
  %1555 = vmatprep.subr.bf16.mxu0 %v1436
  %1556 = vmatpush2.bf16.msra.mxu0 %v1435
  %1557 = vmatprep.subr.bf16.mxu0 %v1432
  %1558 = vmatpush2.bf16.msra.mxu0 %v1431
  %1559 = vmatprep.mubr.bf16.mxu0 %v1204
  %1560 = vmatmul.mubr.bf16.gmra.mxu0 %v1203
  %v1561 = vpop.f32.mrf.mxu0
  %v1562 = vadd.f32 0.0, %v1561
  %v1563 = vpop.f32.mrf.mxu0
  %v1564 = vadd.f32 0.0, %v1563
  %v1565 = vpop.f32.mrf.mxu0
  %v1566 = vadd.f32 0.0, %v1565
  %v1567 = vpop.f32.mrf.mxu0
  %v1568 = vadd.f32 0.0, %v1567
  %1569 = vdwg.mxu0
  %1570 = vmatprep.subr.bf16.mxu0 %v1430
  %1571 = vmatpush1.bf16.msra.mxu0 %v1429
  %1572 = vmatprep.subr.bf16.mxu0 %v1426
  %1573 = vmatpush1.bf16.msra.mxu0 %v1425
  %1574 = vmatprep.subr.bf16.mxu0 %v1422
  %1575 = vmatpush1.bf16.msra.mxu0 %v1421
  %1576 = vmatprep.subr.bf16.mxu0 %v1418
  %1577 = vmatpush1.bf16.msra.mxu0 %v1417
  %1578 = vmatprep.subr.bf16.mxu0 %v1414
  %1579 = vmatpush1.bf16.msra.mxu0 %v1413
  %1580 = vmatprep.subr.bf16.mxu0 %v1410
  %1581 = vmatpush1.bf16.msra.mxu0 %v1409
  %1582 = vmatprep.subr.bf16.mxu0 %v1406
  %1583 = vmatpush1.bf16.msra.mxu0 %v1405
  %1584 = vmatprep.subr.bf16.mxu0 %v1402
  %1585 = vmatpush1.bf16.msra.mxu0 %v1401
  %1586 = vmatprep.subr.bf16.mxu0 %v1462
  %1587 = vmatpush2.bf16.msra.mxu0 %v1461
  %1588 = vmatprep.subr.bf16.mxu0 %v1458
  %1589 = vmatpush2.bf16.msra.mxu0 %v1457
  %1590 = vmatprep.subr.bf16.mxu0 %v1454
  %1591 = vmatpush2.bf16.msra.mxu0 %v1453
  %1592 = vmatprep.subr.bf16.mxu0 %v1450
  %1593 = vmatpush2.bf16.msra.mxu0 %v1449
  %1594 = vmatprep.subr.bf16.mxu0 %v1446
  %1595 = vmatpush2.bf16.msra.mxu0 %v1445
  %1596 = vmatprep.subr.bf16.mxu0 %v1442
  %1597 = vmatpush2.bf16.msra.mxu0 %v1441
  %1598 = vmatprep.subr.bf16.mxu0 %v1438
  %1599 = vmatpush2.bf16.msra.mxu0 %v1437
  %1600 = vmatprep.subr.bf16.mxu0 %v1434
  %1601 = vmatpush2.bf16.msra.mxu0 %v1433
  %1602 = vmatprep.mubr.bf16.mxu0 %v1204
  %1603 = vmatmul.mubr.bf16.gmra.mxu0 %v1203
  %v1604 = vpop.f32.mrf.mxu0
  %v1605 = vadd.f32 0.0, %v1604
  %v1606 = vpop.f32.mrf.mxu0
  %v1607 = vadd.f32 0.0, %v1606
  %v1608 = vpop.f32.mrf.mxu0
  %v1609 = vadd.f32 0.0, %v1608
  %v1610 = vpop.f32.mrf.mxu0
  %v1611 = vadd.f32 0.0, %v1610
  %1612 = vdwg.mxu0
  %v1613 = vld [vmem:[%s2] sm:$0xff]
  %v1614 = vld [vmem:[%s2 + $0x8] sm:$0xff]
  %1616 = vset.pattern.permute.xlu0 0
  %1617 = vperm.xlu0 %1616, %v1613
  %v1618 = vpop.permute.xlu0 %1617
  %1621 = vset.pattern.permute.xlu0 0
  %1622 = vperm.xlu0 %1621, %v1614
  %v1623 = vpop.permute.xlu0 %1622
  %v1625 = vmul.f32 %v1562, %v1618
  %v1626 = vmul.f32 %v1564, %v1618
  %v1627 = vmul.f32 %v1605, %v1618
  %v1628 = vmul.f32 %v1607, %v1618
  %v1629 = vmul.f32 %v1566, %v1623
  %v1630 = vmul.f32 %v1568, %v1623
  %v1631 = vmul.f32 %v1609, %v1623
  %v1632 = vmul.f32 %v1611, %v1623
  %v1633 = vld [vmem:[%s3] sm:$0xff]
  %v1634 = vld [vmem:[%s3 + $0x8] sm:$0xff]
  %1636 = vset.pattern.permute.xlu0 0
  %1637 = vperm.xlu0 %1636, %v1633
  %v1638 = vpop.permute.xlu0 %1637
  %1641 = vset.pattern.permute.xlu0 0
  %1642 = vperm.xlu0 %1641, %v1634
  %v1643 = vpop.permute.xlu0 %1642
  %v1645 = vadd.f32 %v1625, %v1638
  %v1646 = vadd.f32 %v1626, %v1638
  %v1647 = vadd.f32 %v1627, %v1638
  %v1648 = vadd.f32 %v1628, %v1638
  %v1649 = vadd.f32 %v1629, %v1643
  %v1650 = vadd.f32 %v1630, %v1643
  %v1651 = vadd.f32 %v1631, %v1643
  %v1652 = vadd.f32 %v1632, %v1643
  %v1653 = vmax.f32 %v1645, 0.0
  %v1654 = vmax.f32 %v1646, 0.0
  %v1655 = vmax.f32 %v1647, 0.0
  %v1656 = vmax.f32 %v1648, 0.0
  %v1657 = vmax.f32 %v1649, 0.0
  %v1658 = vmax.f32 %v1650, 0.0
  %v1659 = vmax.f32 %v1651, 0.0
  %v1660 = vmax.f32 %v1652, 0.0
  %1661 = vst [vmem:[%s5] sm:$0xff] %v1653
  %1662 = vst [vmem:[%s5 + $0x8] sm:$0xff] %v1654
  %1663 = vst [vmem:[%s5 + $0x10] sm:$0xff] %v1657
  %1664 = vst [vmem:[%s5 + $0x18] sm:$0xff] %v1658
  %s1665 = scalar_lea.vmem %s5, 32
  %1666 = vst [vmem:[%s1665] sm:$0xff] %v1655
  %1667 = vst [vmem:[%s1665 + $0x8] sm:$0xff] %v1656
  %1668 = vst [vmem:[%s1665 + $0x10] sm:$0xff] %v1659
  %1669 = vst [vmem:[%s1665 + $0x18] sm:$0xff] %v1660
  // Predicated region
  $region22: #{conv_bn_relu.1} parent=0 // pred_check
    _
  $region23: #{conv_bn_relu.1} parent=0 // pred_check_branch
    %1671 = sbr.rel (0) target = $region25
  $region24: #{conv_bn_relu.1} parent=0 // pred_region
    _
  $region25: #{conv_bn_relu.1} parent=0 // pred_fallthru
    _
  // Predicated region
  $region26: #{conv_bn_relu.1} parent=0 // pred_check
    _
  $region27: #{conv_bn_relu.1} parent=0 // pred_check_branch
    %1673 = sbr.rel (0) target = $region29
  $region28: #{conv_bn_relu.1} parent=0 // pred_region
    _
  $region29: #{conv_bn_relu.1} parent=0 // pred_fallthru
    _

</llo_original>
